<compile_context>
chip_gen: v7x
topology: tpu7x:2x2x1
jax: 0.10.0
libtpu: 0.0.40
codegen_flags: <defaults>
</compile_context>

<pallas_src>
import functools
import math

import jax
import jax.numpy as jnp
from jax.experimental import pallas as pl
from jax.experimental.pallas import tpu as pltpu

TEMPERATURE = 0.07
BASE_TEMPERATURE = 0.07  # module __init__ sets base_temperature = temperature


def _round_up(x, m):
    return ((x + m - 1) // m) * m


def _supcon_kernel(q_ref, kt_ref, spos_ref, cnt_ref, loss_ref,
                   m_sc, l_sc, *, tq, tk, batch):
    # q_ref:    (tq, Dp)          bf16  anchor rows (scaled by 1/sqrt(T))
    # kt_ref:   (n_kt, Dp, tk)    bf16  resident, pre-transposed key tiles
    # spos_ref: (tq, 1)           f32   sum of positive-pair logits (hoisted)
    # cnt_ref:  (tq, 1)           f32   number of positives per anchor (hoisted)
    # loss_ref: (tq, 1)           f32   per-anchor loss (written on last j)
    # scratch:  m (running row max), l (running denominator) -- (tq, 1) f32
    i = pl.program_id(0)           # anchor-row tile  ("parallel")
    j = pl.program_id(1)           # key-column tile  ("arbitrary", reduction)

    @pl.when(j == 0)
    def _init():
        m_sc[...] = jnp.full_like(m_sc, -jnp.inf)
        l_sc[...] = jnp.zeros_like(l_sc)

    # (tq, tk) logits, already divided by temperature; f32 MXU accumulation.
    # Key tile is a VMEM-local dynamic load from the resident key buffer.
    kt = kt_ref[j]                                       # (Dp, tk)
    s = jax.lax.dot_general(q_ref[...], kt,
                            (((1,), (0,)), ((), ())),
                            preferred_element_type=jnp.float32)

    row_start = i * tq
    col_start = j * tk
    diag_overlap = jnp.logical_and(row_start < col_start + tk,
                                   col_start < row_start + tq)
    has_pad_cols = (col_start + tk) > batch
    needs_mask = jnp.logical_or(diag_overlap, has_pad_cols)

    @pl.when(needs_mask)
    def _masked_update():
        # boundary / diagonal tiles: drop self-pairs from the denominator and
        # padded columns from both the max and the denominator.
        r = jax.lax.broadcasted_iota(jnp.int32, (tq, tk), 0) + row_start
        c = jax.lax.broadcasted_iota(jnp.int32, (tq, tk), 1) + col_start
        col_valid = c < batch
        denom_mask = jnp.logical_and(r != c, col_valid)
        s_valid = jnp.where(col_valid, s, -jnp.inf)
        m_new = jnp.maximum(m_sc[...], jnp.max(s_valid, axis=1, keepdims=True))
        p = jnp.where(denom_mask, jnp.exp(s - m_new), 0.0)
        l_sc[...] = (jnp.exp(m_sc[...] - m_new) * l_sc[...]
                     + jnp.sum(p, axis=1, keepdims=True))
        m_sc[...] = m_new

    @pl.when(jnp.logical_not(needs_mask))
    def _fast_update():
        # interior tiles: no diagonal, no padded columns -> no masks at all.
        m_new = jnp.maximum(m_sc[...], jnp.max(s, axis=1, keepdims=True))
        p = jnp.exp(s - m_new)
        l_sc[...] = (jnp.exp(m_sc[...] - m_new) * l_sc[...]
                     + jnp.sum(p, axis=1, keepdims=True))
        m_sc[...] = m_new

    @pl.when(j == pl.num_programs(1) - 1)
    def _finalize():
        # mean_log_prob = sum_pos(s)/cnt - log(sum_{j != i} exp(s_ij))
        log_denom = m_sc[...] + jnp.log(l_sc[...])
        mean_log_prob = spos_ref[...] / cnt_ref[...] - log_denom
        loss_ref[...] = -(TEMPERATURE / BASE_TEMPERATURE) * mean_log_prob


def scl_supcon_loss(features, labels, *, tq=256, tk=512):
    """features: (B, 1, D) float; labels: (B,) int -> scalar float32 loss."""
    B, contrast_count, D = features.shape
    assert contrast_count == 1, "module is used with contrast_count == 1"

    inv_sqrt_t = 1.0 / math.sqrt(TEMPERATURE)

    # tiling: clamp tiles to the (128-aligned) batch, cdiv-style padding only.
    b128 = _round_up(B, 128)
    tq = min(tq, b128)
    tk = min(tk, b128)
    b_pad_q = _round_up(B, tq)       # anchor rows (at most tq-1 dead rows)
    b_pad_k = _round_up(B, tk)       # key columns (at most one boundary tile)
    d_pad = _round_up(D, 128)
    n_kt = b_pad_k // tk

    # fold 1/temperature into the matmul operands (1/sqrt(T) on each side) and
    # cast once to bf16: native MXU dtype, half the DMA/vreg footprint.
    f32 = features.reshape(B, D).astype(jnp.float32) * inv_sqrt_t
    fb = f32.astype(jnp.bfloat16)
    fbf = fb.astype(jnp.float32)     # bf16-rounded values, f32 math below

    # Hoisted numerator + positive counts (O(B*D) via per-class feature sums):
    #   spos_i = f_i . (sum_{j: label_j == label_i} f_j - f_i)   [already /T]
    #   cnt_i  = multiplicity(label_i) - 1
    _, inv_ids = jnp.unique(labels, return_inverse=True, size=B)
    inv_ids = inv_ids.reshape(B)
    class_sum = jax.ops.segment_sum(fbf, inv_ids, num_segments=B)
    class_cnt = jax.ops.segment_sum(jnp.ones((B,), jnp.float32), inv_ids,
                                    num_segments=B)
    cnt = class_cnt[inv_ids] - 1.0
    spos = jnp.sum(fbf * (class_sum[inv_ids] - fbf), axis=1)

    # anchor rows (padded), and key tiles pre-transposed to (n_kt, Dp, tk) so
    # the kernel contraction needs no per-step transpose and the whole key
    # matrix stays resident in VMEM (DMA'd once).
    q = jnp.pad(fb, ((0, b_pad_q - B), (0, d_pad - D)))
    k_pad = jnp.pad(fb, ((0, b_pad_k - B), (0, d_pad - D)))
    kt_tiles = jnp.swapaxes(k_pad.reshape(n_kt, tk, d_pad), 1, 2)

    spos_p = jnp.pad(spos, (0, b_pad_q - B)).reshape(b_pad_q, 1)
    cnt_p = jnp.pad(cnt, (0, b_pad_q - B)).reshape(b_pad_q, 1)

    grid = (b_pad_q // tq, b_pad_k // tk)
    kernel = functools.partial(_supcon_kernel, tq=tq, tk=tk, batch=B)

    loss_rows = pl.pallas_call(
        kernel,
        out_shape=jax.ShapeDtypeStruct((b_pad_q, 1), jnp.float32),
        grid_spec=pltpu.PrefetchScalarGridSpec(
            num_scalar_prefetch=0,
            grid=grid,
            in_specs=[
                pl.BlockSpec((tq, d_pad), lambda i, j: (i, 0)),        # anchors
                pl.BlockSpec((n_kt, d_pad, tk), lambda i, j: (0, 0, 0)),  # keys (resident)
                pl.BlockSpec((tq, 1), lambda i, j: (i, 0)),            # spos (hoisted)
                pl.BlockSpec((tq, 1), lambda i, j: (i, 0)),            # cnt  (hoisted)
            ],
            out_specs=pl.BlockSpec((tq, 1), lambda i, j: (i, 0)),
            scratch_shapes=[pltpu.VMEM((tq, 1), jnp.float32)] * 2,
        ),
        compiler_params=pltpu.CompilerParams(
            dimension_semantics=("parallel", "arbitrary"),
            # above the 32 MiB default, under v7x's 64 MiB/TC; raise further on
            # v5e/v6e (128 MiB) if tk is pushed to 1024-2048.
            vmem_limit_bytes=48 * 1024 * 1024,
        ),
    )(q, kt_tiles, spos_p, cnt_p)

    return jnp.mean(loss_rows[:B, 0])


def _reference_loss_f32(features, labels):
    # literal translation of the PyTorch forward, full f32 (spec reference)
    B, _, D = features.shape
    f = features.reshape(B, D).astype(jnp.float32)
    lbl = labels.reshape(B, 1)
    mask = (lbl == lbl.T).astype(jnp.float32)
    all_pairs = (f @ f.T) / TEMPERATURE
    logits = all_pairs - jnp.max(all_pairs, axis=1, keepdims=True)
    logits_mask = 1.0 - jnp.eye(B, dtype=jnp.float32)
    mask = mask * logits_mask
    exp_logits = jnp.exp(logits) * logits_mask
    log_prob = jnp.log(jnp.exp(logits) / jnp.sum(exp_logits, 1, keepdims=True)) * mask
    mean_log_prob = jnp.sum(log_prob, 1) / jnp.sum(mask, 1)
    return jnp.mean(-(TEMPERATURE / BASE_TEMPERATURE) * mean_log_prob)


def _reference_loss_bf16(features, labels):
    # mirrors the kernel's numerics: bf16 operands (1/sqrt(T) folded in),
    # f32 accumulation, stable (logits - log denom) form.
    B, _, D = features.shape
    inv_sqrt_t = 1.0 / math.sqrt(TEMPERATURE)
    fb = (features.reshape(B, D).astype(jnp.float32) * inv_sqrt_t).astype(jnp.bfloat16)
    s = jnp.dot(fb, fb.T, preferred_element_type=jnp.float32)  # == all_pairs / T
    lbl = labels.reshape(B, 1)
    eye = jnp.eye(B, dtype=bool)
    pos = jnp.logical_and(lbl == lbl.T, ~eye)
    m = jnp.max(s, axis=1, keepdims=True)
    l = jnp.sum(jnp.where(~eye, jnp.exp(s - m), 0.0), axis=1, keepdims=True)
    log_denom = (m + jnp.log(l))[:, 0]
    mean_lp = (jnp.sum(jnp.where(pos, s, 0.0), axis=1)
               / jnp.sum(pos.astype(jnp.float32), axis=1)) - log_denom
    return jnp.mean(-(TEMPERATURE / BASE_TEMPERATURE) * mean_lp)


if __name__ == "__main__":
    key = jax.random.PRNGKey(0)

    # --- test 1: tiny batch, single tile ------------------------------------
    B, D = 8, 32
    feats = jax.random.normal(key, (B, 1, D), dtype=jnp.float32)
    feats = feats / jnp.linalg.norm(feats, axis=-1, keepdims=True)
    labels = jnp.array([0, 0, 1, 1, 2, 2, 3, 3], dtype=jnp.int32)

    loss = scl_supcon_loss(feats, labels)
    jax.block_until_ready(loss)

    ref_bf16 = _reference_loss_bf16(feats, labels)
    assert jnp.allclose(loss, ref_bf16, rtol=1e-3, atol=1e-3), (loss, ref_bf16)
    ref_f32 = _reference_loss_f32(feats, labels)
    assert jnp.allclose(loss, ref_f32, rtol=2e-2, atol=2e-2), (loss, ref_f32)

    # --- test 2: multi-tile grid, exercises mask-free fast path + boundary ---
    B2, D2 = 200, 64
    feats2 = jax.random.normal(jax.random.PRNGKey(1), (B2, 1, D2), jnp.float32)
    feats2 = feats2 / jnp.linalg.norm(feats2, axis=-1, keepdims=True)
    labels2 = (jnp.arange(B2, dtype=jnp.int32) % 10)  # every anchor has positives

    loss2 = scl_supcon_loss(feats2, labels2, tq=128, tk=128)
    jax.block_until_ready(loss2)
    ref2 = _reference_loss_bf16(feats2, labels2)
    assert jnp.allclose(loss2, ref2, rtol=2e-3, atol=2e-3), (loss2, ref2)

    print("KERNEL_OK")
</pallas_src>

<mosaic_0001>
module attributes {stable_mosaic.version = 11 : i64} {
  func.func @_supcon_kernel(%arg0: i32, %arg1: i32, %arg2: memref<128x128xbf16, #tpu.memory_space<vmem>>, %arg3: memref<1x128x128xbf16, #tpu.memory_space<vmem>>, %arg4: memref<128x1xf32, #tpu.memory_space<vmem>>, %arg5: memref<128x1xf32, #tpu.memory_space<vmem>>, %arg6: memref<128x1xf32, #tpu.memory_space<vmem>>, %arg7: memref<128x1xf32, #tpu.memory_space<vmem>>, %arg8: memref<128x1xf32, #tpu.memory_space<vmem>>) attributes {dimension_semantics = [#tpu.dimension_semantics<parallel>, #tpu.dimension_semantics<arbitrary>], iteration_bounds = array<i64: 1, 1>, scalar_prefetch = 0 : i64, scratch_operands = 2 : i64, tpu.core_type = #tpu.core_type<tc>, window_params = [{transform_indices = @transform_0, window_bounds = array<i64: 128, 128>}, {pipeline_mode = #tpu.pipeline_mode<synchronous>, transform_indices = @transform_1, window_bounds = array<i64: 1, 128, 128>}, {transform_indices = @transform_2, window_bounds = array<i64: 128, 1>}, {transform_indices = @transform_3, window_bounds = array<i64: 128, 1>}, {transform_indices = @transform_4, window_bounds = array<i64: 128, 1>}]} {
    %c0_i32 = arith.constant 0 : i32
    %0 = arith.cmpi eq, %arg1, %c0_i32 : i32
    %1 = arith.extui %0 : i1 to i32
    %c0_i32_0 = arith.constant 0 : i32
    %2 = arith.cmpi ne, %1, %c0_i32_0 : i32
    scf.if %2 {
      %cst_12 = arith.constant 0xFF800000 : f32
      %26 = vector.broadcast %cst_12 : f32 to vector<128x1xf32>
      %c0_13 = arith.constant 0 : index
      %c0_14 = arith.constant 0 : index
      %27 = vector.load %arg7[%c0_13, %c0_14] : memref<128x1xf32, #tpu.memory_space<vmem>>, vector<128x1xf32>
      tpu.vector_store %arg7[%c0_13, %c0_14], %26 {strides = array<i32>} : memref<128x1xf32, #tpu.memory_space<vmem>>, vector<128x1xf32>,
      %cst_15 = arith.constant 0.000000e+00 : f32
      %28 = vector.broadcast %cst_15 : f32 to vector<128x1xf32>
      %c0_16 = arith.constant 0 : index
      %c0_17 = arith.constant 0 : index
      %29 = vector.load %arg8[%c0_16, %c0_17] : memref<128x1xf32, #tpu.memory_space<vmem>>, vector<128x1xf32>
      tpu.vector_store %arg8[%c0_16, %c0_17], %28 {strides = array<i32>} : memref<128x1xf32, #tpu.memory_space<vmem>>, vector<128x1xf32>,
    } else {
    }
    %3 = arith.index_cast %arg1 : i32 to index
    %c0 = arith.constant 0 : index
    %c0_1 = arith.constant 0 : index
    %4 = vector.load %arg3[%3, %c0, %c0_1] : memref<1x128x128xbf16, #tpu.memory_space<vmem>>, vector<1x128x128xbf16>
    %5 = vector.shape_cast %4 : vector<1x128x128xbf16> to vector<128x128xbf16>
    %c0_2 = arith.constant 0 : index
    %c0_3 = arith.constant 0 : index
    %6 = vector.load %arg2[%c0_2, %c0_3] : memref<128x128xbf16, #tpu.memory_space<vmem>>, vector<128x128xbf16>
    %cst = arith.constant dense<0.000000e+00> : vector<128x128xf32>
    %7 = tpu.matmul %6, %5, %cst {dimension_numbers = #tpu.dot_dimension_numbers<[1], [0], [0], [1], [0, 0, 1, 1], [], []>} : vector<128x128xbf16>, vector<128x128xbf16>, vector<128x128xf32> -> vector<128x128xf32>
    %c128_i32 = arith.constant 128 : i32
    %8 = arith.muli %arg0, %c128_i32 : i32
    %c128_i32_4 = arith.constant 128 : i32
    %9 = arith.muli %arg1, %c128_i32_4 : i32
    %c128_i32_5 = arith.constant 128 : i32
    %10 = arith.addi %9, %c128_i32_5 : i32
    %11 = arith.cmpi slt, %8, %10 : i32
    %c128_i32_6 = arith.constant 128 : i32
    %12 = arith.addi %8, %c128_i32_6 : i32
    %13 = arith.cmpi slt, %9, %12 : i32
    %14 = arith.andi %11, %13 : i1
    %c128_i32_7 = arith.constant 128 : i32
    %15 = arith.addi %9, %c128_i32_7 : i32
    %c8_i32 = arith.constant 8 : i32
    %16 = arith.cmpi sgt, %15, %c8_i32 : i32
    %17 = arith.ori %14, %16 : i1
    %18 = arith.extui %17 : i1 to i32
    %c0_i32_8 = arith.constant 0 : i32
    %19 = arith.cmpi ne, %18, %c0_i32_8 : i32
    scf.if %19 {
      %26 = tpu.iota {dimensions = array<i32: 0>} : vector<128x128xi32>
      %27 = vector.broadcast %8 : i32 to vector<128x128xi32>
      %28 = arith.addi %26, %27 : vector<128x128xi32>
      %29 = tpu.iota {dimensions = array<i32: 1>} : vector<128x128xi32>
      %30 = vector.broadcast %9 : i32 to vector<128x128xi32>
      %31 = arith.addi %29, %30 : vector<128x128xi32>
      %c8_i32_12 = arith.constant 8 : i32
      %32 = vector.broadcast %c8_i32_12 : i32 to vector<128x128xi32>
      %33 = arith.cmpi slt, %31, %32 : vector<128x128xi32>
      %34 = arith.cmpi ne, %28, %31 : vector<128x128xi32>
      %35 = arith.andi %34, %33 : vector<128x128xi1>
      %cst_13 = arith.constant 0xFF800000 : f32
      %36 = vector.broadcast %cst_13 : f32 to vector<128x128xf32>
      %37 = arith.select %33, %7, %36 : vector<128x128xi1>, vector<128x128xf32>
      %c0_14 = arith.constant 0 : index
      %c0_15 = arith.constant 0 : index
      %38 = vector.load %arg7[%c0_14, %c0_15] : memref<128x1xf32, #tpu.memory_space<vmem>>, vector<128x1xf32>
      %cst_16 = arith.constant dense<0xFF800000> : vector<128xf32>
      %39 = vector.multi_reduction <maximumf>, %37, %cst_16 [1] : vector<128x128xf32> to vector<128xf32>
      %40 = vector.shape_cast %39 : vector<128xf32> to vector<128x1xf32>
      %41 = arith.maximumf %38, %40 : vector<128x1xf32>
      %42 = vector.broadcast %41 : vector<128x1xf32> to vector<128x128xf32>
      %43 = arith.subf %7, %42 : vector<128x128xf32>
      %44 = math.exp %43 : vector<128x128xf32>
      %cst_17 = arith.constant 0.000000e+00 : f32
      %45 = vector.broadcast %cst_17 : f32 to vector<128x128xf32>
      %46 = arith.select %35, %44, %45 : vector<128x128xi1>, vector<128x128xf32>
      %c0_18 = arith.constant 0 : index
      %c0_19 = arith.constant 0 : index
      %47 = vector.load %arg7[%c0_18, %c0_19] : memref<128x1xf32, #tpu.memory_space<vmem>>, vector<128x1xf32>
      %48 = arith.subf %47, %41 : vector<128x1xf32>
      %49 = math.exp %48 : vector<128x1xf32>
      %c0_20 = arith.constant 0 : index
      %c0_21 = arith.constant 0 : index
      %50 = vector.load %arg8[%c0_20, %c0_21] : memref<128x1xf32, #tpu.memory_space<vmem>>, vector<128x1xf32>
      %51 = arith.mulf %49, %50 : vector<128x1xf32>
      %cst_22 = arith.constant dense<0.000000e+00> : vector<128xf32>
      %52 = vector.multi_reduction <add>, %46, %cst_22 [1] : vector<128x128xf32> to vector<128xf32>
      %53 = vector.shape_cast %52 : vector<128xf32> to vector<128x1xf32>
      %54 = arith.addf %51, %53 : vector<128x1xf32>
      %c0_23 = arith.constant 0 : index
      %c0_24 = arith.constant 0 : index
      %55 = vector.load %arg8[%c0_23, %c0_24] : memref<128x1xf32, #tpu.memory_space<vmem>>, vector<128x1xf32>
      tpu.vector_store %arg8[%c0_23, %c0_24], %54 {strides = array<i32>} : memref<128x1xf32, #tpu.memory_space<vmem>>, vector<128x1xf32>,
      %c0_25 = arith.constant 0 : index
      %c0_26 = arith.constant 0 : index
      %56 = vector.load %arg7[%c0_25, %c0_26] : memref<128x1xf32, #tpu.memory_space<vmem>>, vector<128x1xf32>
      tpu.vector_store %arg7[%c0_25, %c0_26], %41 {strides = array<i32>} : memref<128x1xf32, #tpu.memory_space<vmem>>, vector<128x1xf32>,
    } else {
    }
    %true = arith.constant true
    %20 = arith.xori %17, %true : i1
    %21 = arith.extui %20 : i1 to i32
    %c0_i32_9 = arith.constant 0 : i32
    %22 = arith.cmpi ne, %21, %c0_i32_9 : i32
    scf.if %22 {
      %c0_12 = arith.constant 0 : index
      %c0_13 = arith.constant 0 : index
      %26 = vector.load %arg7[%c0_12, %c0_13] : memref<128x1xf32, #tpu.memory_space<vmem>>, vector<128x1xf32>
      %cst_14 = arith.constant dense<0xFF800000> : vector<128xf32>
      %27 = vector.multi_reduction <maximumf>, %7, %cst_14 [1] : vector<128x128xf32> to vector<128xf32>
      %28 = vector.shape_cast %27 : vector<128xf32> to vector<128x1xf32>
      %29 = arith.maximumf %26, %28 : vector<128x1xf32>
      %30 = vector.broadcast %29 : vector<128x1xf32> to vector<128x128xf32>
      %31 = arith.subf %7, %30 : vector<128x128xf32>
      %32 = math.exp %31 : vector<128x128xf32>
      %c0_15 = arith.constant 0 : index
      %c0_16 = arith.constant 0 : index
      %33 = vector.load %arg7[%c0_15, %c0_16] : memref<128x1xf32, #tpu.memory_space<vmem>>, vector<128x1xf32>
      %34 = arith.subf %33, %29 : vector<128x1xf32>
      %35 = math.exp %34 : vector<128x1xf32>
      %c0_17 = arith.constant 0 : index
      %c0_18 = arith.constant 0 : index
      %36 = vector.load %arg8[%c0_17, %c0_18] : memref<128x1xf32, #tpu.memory_space<vmem>>, vector<128x1xf32>
      %37 = arith.mulf %35, %36 : vector<128x1xf32>
      %cst_19 = arith.constant dense<0.000000e+00> : vector<128xf32>
      %38 = vector.multi_reduction <add>, %32, %cst_19 [1] : vector<128x128xf32> to vector<128xf32>
      %39 = vector.shape_cast %38 : vector<128xf32> to vector<128x1xf32>
      %40 = arith.addf %37, %39 : vector<128x1xf32>
      %c0_20 = arith.constant 0 : index
      %c0_21 = arith.constant 0 : index
      %41 = vector.load %arg8[%c0_20, %c0_21] : memref<128x1xf32, #tpu.memory_space<vmem>>, vector<128x1xf32>
      tpu.vector_store %arg8[%c0_20, %c0_21], %40 {strides = array<i32>} : memref<128x1xf32, #tpu.memory_space<vmem>>, vector<128x1xf32>,
      %c0_22 = arith.constant 0 : index
      %c0_23 = arith.constant 0 : index
      %42 = vector.load %arg7[%c0_22, %c0_23] : memref<128x1xf32, #tpu.memory_space<vmem>>, vector<128x1xf32>
      tpu.vector_store %arg7[%c0_22, %c0_23], %29 {strides = array<i32>} : memref<128x1xf32, #tpu.memory_space<vmem>>, vector<128x1xf32>,
    } else {
    }
    %c0_i32_10 = arith.constant 0 : i32
    %23 = arith.cmpi eq, %arg1, %c0_i32_10 : i32
    %24 = arith.extui %23 : i1 to i32
    %c0_i32_11 = arith.constant 0 : i32
    %25 = arith.cmpi ne, %24, %c0_i32_11 : i32
    scf.if %25 {
      %c0_12 = arith.constant 0 : index
      %c0_13 = arith.constant 0 : index
      %26 = vector.load %arg7[%c0_12, %c0_13] : memref<128x1xf32, #tpu.memory_space<vmem>>, vector<128x1xf32>
      %c0_14 = arith.constant 0 : index
      %c0_15 = arith.constant 0 : index
      %27 = vector.load %arg8[%c0_14, %c0_15] : memref<128x1xf32, #tpu.memory_space<vmem>>, vector<128x1xf32>
      %28 = math.log %27 : vector<128x1xf32>
      %29 = arith.addf %26, %28 : vector<128x1xf32>
      %c0_16 = arith.constant 0 : index
      %c0_17 = arith.constant 0 : index
      %30 = vector.load %arg4[%c0_16, %c0_17] : memref<128x1xf32, #tpu.memory_space<vmem>>, vector<128x1xf32>
      %c0_18 = arith.constant 0 : index
      %c0_19 = arith.constant 0 : index
      %31 = vector.load %arg5[%c0_18, %c0_19] : memref<128x1xf32, #tpu.memory_space<vmem>>, vector<128x1xf32>
      %32 = arith.divf %30, %31 : vector<128x1xf32>
      %33 = arith.subf %32, %29 : vector<128x1xf32>
      %cst_20 = arith.constant -1.000000e+00 : f32
      %34 = vector.broadcast %cst_20 : f32 to vector<128x1xf32>
      %35 = arith.mulf %34, %33 : vector<128x1xf32>
      %c0_21 = arith.constant 0 : index
      %c0_22 = arith.constant 0 : index
      %36 = vector.load %arg6[%c0_21, %c0_22] : memref<128x1xf32, #tpu.memory_space<vmem>>, vector<128x1xf32>
      tpu.vector_store %arg6[%c0_21, %c0_22], %35 {strides = array<i32>} : memref<128x1xf32, #tpu.memory_space<vmem>>, vector<128x1xf32>,
    } else {
    }
    return
  }
  func.func @transform_0(%arg0: i32, %arg1: i32) -> (i32, i32) {
    %c0_i32 = arith.constant 0 : i32
    %c0_i32_0 = arith.constant 0 : i32
    return %arg0, %c0_i32 : i32, i32
  }
  func.func @transform_1(%arg0: i32, %arg1: i32) -> (i32, i32, i32) {
    %c0_i32 = arith.constant 0 : i32
    %c0_i32_0 = arith.constant 0 : i32
    %c0_i32_1 = arith.constant 0 : i32
    %c0_i32_2 = arith.constant 0 : i32
    return %c0_i32, %c0_i32_0, %c0_i32_1 : i32, i32, i32
  }
  func.func @transform_2(%arg0: i32, %arg1: i32) -> (i32, i32) {
    %c0_i32 = arith.constant 0 : i32
    %c0_i32_0 = arith.constant 0 : i32
    return %arg0, %c0_i32 : i32, i32
  }
  func.func @transform_3(%arg0: i32, %arg1: i32) -> (i32, i32) {
    %c0_i32 = arith.constant 0 : i32
    %c0_i32_0 = arith.constant 0 : i32
    return %arg0, %c0_i32 : i32, i32
  }
  func.func @transform_4(%arg0: i32, %arg1: i32) -> (i32, i32) {
    %c0_i32 = arith.constant 0 : i32
    %c0_i32_0 = arith.constant 0 : i32
    return %arg0, %c0_i32 : i32, i32
  }
}

</mosaic_0001>

<llo_original>
// kernel: tpu_custom_call.1
$region0: #{tpu_custom_call.1}
  #allocation0 [shape = 'u32[]', space=smem, size = 0x4, offset = 0x4, fixed_abs, tag = 'smem constant byte address 0x4 - core index']
  #allocation1 [shape = 'u32[144,128]{1,0:T(1,128)}', space=vmem, size = 0x12000, scoped, tag = 'internal scratch']
  #allocation2 [shape = 'f32[128,1]{1,0:T(8,128)}', space=vmem, size = 0x10000, scoped, tag = 'scratch operand']
  #allocation3 [shape = 'f32[128,1]{1,0:T(8,128)}', space=vmem, size = 0x10000, scoped, tag = 'scratch operand']
  %s0 = inlined_call_operand.vmem [shape: bf16[128,128], index: 0, kind: input, shape index: {}]
  %s1 = inlined_call_operand.vmem [shape: bf16[1,128,128], index: 1, kind: input, shape index: {}]
  %s2 = inlined_call_operand.vmem [shape: f32[128,1], index: 2, kind: input, shape index: {}]
  %s3 = inlined_call_operand.vmem [shape: f32[128,1], index: 3, kind: input, shape index: {}]
  %s4 = inlined_call_operand.vmem [shape: f32[128,1], index: 4, kind: output, shape index: {}]
  %s5 = sld [smem:[#allocation0]]
  $region42: #{tpu_custom_call.1} parent=0
    _
  %s7 = ssub.s32 1, %s5
  %s8 = scalar_select 0, %s7, %s5
  // Predicated region
  $region2: #{tpu_custom_call.1} parent=0 // pred_check
    _
  $region3: #{tpu_custom_call.1} parent=0 // pred_check_branch
    %10 = sbr.rel (0) target = $region5
  $region4: #{tpu_custom_call.1} parent=0 // pred_region
    _
  $region5: #{tpu_custom_call.1} parent=0 // pred_fallthru
    _
  // Predicated region
  $region6: #{tpu_custom_call.1} parent=0 // pred_check
    _
  $region7: #{tpu_custom_call.1} parent=0 // pred_check_branch
    %12 = sbr.rel (0) target = $region9
  $region8: #{tpu_custom_call.1} parent=0 // pred_region
    _
  $region9: #{tpu_custom_call.1} parent=0 // pred_fallthru
    _
  // Predicated region
  $region10: #{tpu_custom_call.1} parent=0 // pred_check
    _
  $region11: #{tpu_custom_call.1} parent=0 // pred_check_branch
    %14 = sbr.rel (0) target = $region13
  $region12: #{tpu_custom_call.1} parent=0 // pred_region
    _
  $region13: #{tpu_custom_call.1} parent=0 // pred_fallthru
    _
  // Predicated region
  $region14: #{tpu_custom_call.1} parent=0 // pred_check
    _
  $region15: #{tpu_custom_call.1} parent=0 // pred_check_branch
    %16 = sbr.rel (0) target = $region17
  $region16: #{tpu_custom_call.1} parent=0 // pred_region
    _
  $region17: #{tpu_custom_call.1} parent=0 // pred_fallthru
    _
  %p18 = scmp.eq.s32.totalorder 0, 0
  // Predicated region
  $region18: #{tpu_custom_call.1} parent=0 // pred_check
    %p19 = pneg %p18
  $region19: #{tpu_custom_call.1} parent=0 // pred_check_branch
    %21 = sbr.rel (%p19) target = $region21
  $region20: #{tpu_custom_call.1} parent=0 // pred_region
    %vm22 = vcmask 7168
    %23 = vst.msk [vmem:[#allocation2] sm:$0xff] %vm22, -inf
    %24 = vst.msk [vmem:[#allocation2 + $0x8] sm:$0xff] %vm22, -inf
    %25 = vst.msk [vmem:[#allocation2 + $0x10] sm:$0xff] %vm22, -inf
    %26 = vst.msk [vmem:[#allocation2 + $0x18] sm:$0xff] %vm22, -inf
    %27 = vst.msk [vmem:[#allocation2 + $0x20] sm:$0xff] %vm22, -inf
    %28 = vst.msk [vmem:[#allocation2 + $0x28] sm:$0xff] %vm22, -inf
    %29 = vst.msk [vmem:[#allocation2 + $0x30] sm:$0xff] %vm22, -inf
    %30 = vst.msk [vmem:[#allocation2 + $0x38] sm:$0xff] %vm22, -inf
    %31 = vst.msk [vmem:[#allocation2 + $0x40] sm:$0xff] %vm22, -inf
    %32 = vst.msk [vmem:[#allocation2 + $0x48] sm:$0xff] %vm22, -inf
    %33 = vst.msk [vmem:[#allocation2 + $0x50] sm:$0xff] %vm22, -inf
    %34 = vst.msk [vmem:[#allocation2 + $0x58] sm:$0xff] %vm22, -inf
    %35 = vst.msk [vmem:[#allocation2 + $0x60] sm:$0xff] %vm22, -inf
    %36 = vst.msk [vmem:[#allocation2 + $0x68] sm:$0xff] %vm22, -inf
    %37 = vst.msk [vmem:[#allocation2 + $0x70] sm:$0xff] %vm22, -inf
    %38 = vst.msk [vmem:[#allocation2 + $0x78] sm:$0xff] %vm22, -inf
    %39 = vst.msk [vmem:[#allocation3] sm:$0xff] %vm22, 0.0
    %40 = vst.msk [vmem:[#allocation3 + $0x8] sm:$0xff] %vm22, 0.0
    %41 = vst.msk [vmem:[#allocation3 + $0x10] sm:$0xff] %vm22, 0.0
    %42 = vst.msk [vmem:[#allocation3 + $0x18] sm:$0xff] %vm22, 0.0
    %43 = vst.msk [vmem:[#allocation3 + $0x20] sm:$0xff] %vm22, 0.0
    %44 = vst.msk [vmem:[#allocation3 + $0x28] sm:$0xff] %vm22, 0.0
    %45 = vst.msk [vmem:[#allocation3 + $0x30] sm:$0xff] %vm22, 0.0
    %46 = vst.msk [vmem:[#allocation3 + $0x38] sm:$0xff] %vm22, 0.0
    %47 = vst.msk [vmem:[#allocation3 + $0x40] sm:$0xff] %vm22, 0.0
    %48 = vst.msk [vmem:[#allocation3 + $0x48] sm:$0xff] %vm22, 0.0
    %49 = vst.msk [vmem:[#allocation3 + $0x50] sm:$0xff] %vm22, 0.0
    %50 = vst.msk [vmem:[#allocation3 + $0x58] sm:$0xff] %vm22, 0.0
    %51 = vst.msk [vmem:[#allocation3 + $0x60] sm:$0xff] %vm22, 0.0
    %52 = vst.msk [vmem:[#allocation3 + $0x68] sm:$0xff] %vm22, 0.0
    %53 = vst.msk [vmem:[#allocation3 + $0x70] sm:$0xff] %vm22, 0.0
    %54 = vst.msk [vmem:[#allocation3 + $0x78] sm:$0xff] %vm22, 0.0
  $region21: #{tpu_custom_call.1} parent=0 // pred_fallthru
    _
  %s55 = smul.u32 0, 16
  %s56 = smul.addr %s55, 4
  %s57 = scalar_lea.vmem %s1, %s56
  %v58 = vld [vmem:[%s57] sm:$0xf]
  %v59 = vld [vmem:[%s57 + $0x4] sm:$0xf]
  %v60 = vld [vmem:[%s57 + $0x8] sm:$0xf]
  %v61 = vld [vmem:[%s57 + $0xc] sm:$0xf]
  %v62 = vld [vmem:[%s57 + $0x10] sm:$0xf]
  %v63 = vld [vmem:[%s57 + $0x14] sm:$0xf]
  %v64 = vld [vmem:[%s57 + $0x18] sm:$0xf]
  %v65 = vld [vmem:[%s57 + $0x1c] sm:$0xf]
  %v66 = vld [vmem:[%s57 + $0x20] sm:$0xf]
  %v67 = vld [vmem:[%s57 + $0x24] sm:$0xf]
  %v68 = vld [vmem:[%s57 + $0x28] sm:$0xf]
  %v69 = vld [vmem:[%s57 + $0x2c] sm:$0xf]
  %v70 = vld [vmem:[%s57 + $0x30] sm:$0xf]
  %v71 = vld [vmem:[%s57 + $0x34] sm:$0xf]
  %v72 = vld [vmem:[%s57 + $0x38] sm:$0xf]
  %v73 = vld [vmem:[%s57 + $0x3c] sm:$0xf]
  %v74 = vld [vmem:[%s0] sm:$0xf]
  %v75 = vld [vmem:[%s0 + $0x4] sm:$0xf]
  %v76 = vld [vmem:[%s0 + $0x8] sm:$0xf]
  %v77 = vld [vmem:[%s0 + $0xc] sm:$0xf]
  %v78 = vld [vmem:[%s0 + $0x10] sm:$0xf]
  %v79 = vld [vmem:[%s0 + $0x14] sm:$0xf]
  %v80 = vld [vmem:[%s0 + $0x18] sm:$0xf]
  %v81 = vld [vmem:[%s0 + $0x1c] sm:$0xf]
  %v82 = vld [vmem:[%s0 + $0x20] sm:$0xf]
  %v83 = vld [vmem:[%s0 + $0x24] sm:$0xf]
  %v84 = vld [vmem:[%s0 + $0x28] sm:$0xf]
  %v85 = vld [vmem:[%s0 + $0x2c] sm:$0xf]
  %v86 = vld [vmem:[%s0 + $0x30] sm:$0xf]
  %v87 = vld [vmem:[%s0 + $0x34] sm:$0xf]
  %v88 = vld [vmem:[%s0 + $0x38] sm:$0xf]
  %v89 = vld [vmem:[%s0 + $0x3c] sm:$0xf]
  %v106 = vunpack.c.l.b16 %v74
  %v107 = vunpack.c.l.b16 %v75
  %v108 = vunpack.c.l.b16 %v76
  %v109 = vunpack.c.l.b16 %v77
  %v110 = vunpack.c.l.b16 %v78
  %v111 = vunpack.c.l.b16 %v79
  %v112 = vunpack.c.l.b16 %v80
  %v113 = vunpack.c.l.b16 %v81
  %v114 = vunpack.c.l.b16 %v82
  %v115 = vunpack.c.l.b16 %v83
  %v116 = vunpack.c.l.b16 %v84
  %v117 = vunpack.c.l.b16 %v85
  %v118 = vunpack.c.l.b16 %v86
  %v119 = vunpack.c.l.b16 %v87
  %v120 = vunpack.c.l.b16 %v88
  %v121 = vunpack.c.l.b16 %v89
  %v122 = vpack.c.b16 %v107, %v106
  %v123 = vpack.c.b16 %v109, %v108
  %v124 = vpack.c.b16 %v111, %v110
  %v125 = vpack.c.b16 %v113, %v112
  %v126 = vpack.c.b16 %v115, %v114
  %v127 = vpack.c.b16 %v117, %v116
  %v128 = vpack.c.b16 %v119, %v118
  %v129 = vpack.c.b16 %v121, %v120
  %v154 = vunpack.c.l.b16 %v58
  %v155 = vunpack.c.l.b16 %v59
  %v156 = vunpack.c.l.b16 %v60
  %v157 = vunpack.c.l.b16 %v61
  %v158 = vunpack.c.l.b16 %v62
  %v159 = vunpack.c.l.b16 %v63
  %v160 = vunpack.c.l.b16 %v64
  %v161 = vunpack.c.l.b16 %v65
  %v162 = vunpack.c.l.b16 %v66
  %v163 = vunpack.c.l.b16 %v67
  %v164 = vunpack.c.l.b16 %v68
  %v165 = vunpack.c.l.b16 %v69
  %v166 = vunpack.c.l.b16 %v70
  %v167 = vunpack.c.l.b16 %v71
  %v168 = vunpack.c.l.b16 %v72
  %v169 = vunpack.c.l.b16 %v73
  %v170 = vpack.c.b16 %v155, %v154
  %v171 = vpack.c.b16 %v157, %v156
  %v172 = vpack.c.b16 %v159, %v158
  %v173 = vpack.c.b16 %v161, %v160
  %v174 = vpack.c.b16 %v163, %v162
  %v175 = vpack.c.b16 %v165, %v164
  %v176 = vpack.c.b16 %v167, %v166
  %v177 = vpack.c.b16 %v169, %v168
  %186 = vmatprep.subr.bf16.mxu0 0
  %187 = vmatpush1.bf16.msra.mxu0 %v170
  %188 = vmatprep.subr.bf16.mxu0 0
  %189 = vmatpush1.bf16.msra.mxu0 %v171
  %190 = vmatprep.subr.bf16.mxu0 0
  %191 = vmatpush1.bf16.msra.mxu0 %v172
  %192 = vmatprep.subr.bf16.mxu0 0
  %193 = vmatpush1.bf16.msra.mxu0 %v173
  %194 = vmatprep.subr.bf16.mxu0 0
  %195 = vmatpush1.bf16.msra.mxu0 %v174
  %196 = vmatprep.subr.bf16.mxu0 0
  %197 = vmatpush1.bf16.msra.mxu0 %v175
  %198 = vmatprep.subr.bf16.mxu0 0
  %199 = vmatpush1.bf16.msra.mxu0 %v176
  %200 = vmatprep.subr.bf16.mxu0 0
  %201 = vmatpush1.bf16.msra.mxu0 %v177
  %202 = vmatprep.subr.bf16.mxu0 0
  %203 = vmatpush1.bf16.msra.mxu0 0
  %204 = vmatprep.subr.bf16.mxu0 0
  %205 = vmatpush1.bf16.msra.mxu0 0
  %206 = vmatprep.subr.bf16.mxu0 0
  %207 = vmatpush1.bf16.msra.mxu0 0
  %208 = vmatprep.subr.bf16.mxu0 0
  %209 = vmatpush1.bf16.msra.mxu0 0
  %210 = vmatprep.subr.bf16.mxu0 0
  %211 = vmatpush1.bf16.msra.mxu0 0
  %212 = vmatprep.subr.bf16.mxu0 0
  %213 = vmatpush1.bf16.msra.mxu0 0
  %214 = vmatprep.subr.bf16.mxu0 0
  %215 = vmatpush1.bf16.msra.mxu0 0
  %216 = vmatprep.subr.bf16.mxu0 0
  %217 = vmatpush1.bf16.msra.mxu0 0
  %218 = vmatprep.mubr.bf16.mxu0 0
  %219 = vmatmul.mubr.bf16.gmra.mrb[0].mxu0 %v122
  %v220 = vpop.f32.mrb[0].mxu0
  %v221 = vadd.f32 0.0, %v220
  %v222 = vpop.f32.mrb[0].mxu0
  %v223 = vpop.f32.mrb[0].mxu0
  %v224 = vadd.f32 0.0, %v223
  %v225 = vpop.f32.mrb[0].mxu0
  %226 = vmatprep.mubr.bf16.mxu0 0
  %227 = vmatmul.mubr.bf16.gmra.mrb[0].mxu0 %v123
  %v228 = vpop.f32.mrb[0].mxu0
  %v229 = vadd.f32 0.0, %v228
  %v230 = vpop.f32.mrb[0].mxu0
  %v231 = vpop.f32.mrb[0].mxu0
  %v232 = vadd.f32 0.0, %v231
  %v233 = vpop.f32.mrb[0].mxu0
  %234 = vmatprep.mubr.bf16.mxu0 0
  %235 = vmatmul.mubr.bf16.gmra.mrb[0].mxu0 %v124
  %v236 = vpop.f32.mrb[0].mxu0
  %v237 = vadd.f32 0.0, %v236
  %v238 = vpop.f32.mrb[0].mxu0
  %v239 = vpop.f32.mrb[0].mxu0
  %v240 = vadd.f32 0.0, %v239
  %v241 = vpop.f32.mrb[0].mxu0
  %242 = vmatprep.mubr.bf16.mxu0 0
  %243 = vmatmul.mubr.bf16.gmra.mrb[0].mxu0 %v125
  %v244 = vpop.f32.mrb[0].mxu0
  %v245 = vadd.f32 0.0, %v244
  %v246 = vpop.f32.mrb[0].mxu0
  %v247 = vpop.f32.mrb[0].mxu0
  %v248 = vadd.f32 0.0, %v247
  %v249 = vpop.f32.mrb[0].mxu0
  %250 = vmatprep.mubr.bf16.mxu0 0
  %251 = vmatmul.mubr.bf16.gmra.mrb[0].mxu0 %v126
  %v252 = vpop.f32.mrb[0].mxu0
  %v253 = vadd.f32 0.0, %v252
  %v254 = vpop.f32.mrb[0].mxu0
  %v255 = vpop.f32.mrb[0].mxu0
  %v256 = vadd.f32 0.0, %v255
  %v257 = vpop.f32.mrb[0].mxu0
  %258 = vmatprep.mubr.bf16.mxu0 0
  %259 = vmatmul.mubr.bf16.gmra.mrb[0].mxu0 %v127
  %v260 = vpop.f32.mrb[0].mxu0
  %v261 = vadd.f32 0.0, %v260
  %v262 = vpop.f32.mrb[0].mxu0
  %v263 = vpop.f32.mrb[0].mxu0
  %v264 = vadd.f32 0.0, %v263
  %v265 = vpop.f32.mrb[0].mxu0
  %266 = vmatprep.mubr.bf16.mxu0 0
  %267 = vmatmul.mubr.bf16.gmra.mrb[0].mxu0 %v128
  %v268 = vpop.f32.mrb[0].mxu0
  %v269 = vadd.f32 0.0, %v268
  %v270 = vpop.f32.mrb[0].mxu0
  %v271 = vpop.f32.mrb[0].mxu0
  %v272 = vadd.f32 0.0, %v271
  %v273 = vpop.f32.mrb[0].mxu0
  %274 = vmatprep.mubr.bf16.mxu0 0
  %275 = vmatmul.mubr.bf16.gmra.mrb[0].mxu0 %v129
  %v276 = vpop.f32.mrb[0].mxu0
  %v277 = vadd.f32 0.0, %v276
  %v278 = vpop.f32.mrb[0].mxu0
  %v279 = vpop.f32.mrb[0].mxu0
  %v280 = vadd.f32 0.0, %v279
  %v281 = vpop.f32.mrb[0].mxu0
  %282 = vdwg.mxu0
  %s283 = smul.u32 0, 128
  %s284 = smul.u32 0, 128
  %s285 = sadd.s32 %s284, 128
  %p286 = scmp.lt.s32.totalorder %s283, %s285
  %s287 = sadd.s32 %s283, 128
  %p288 = scmp.lt.s32.totalorder %s284, %s287
  %p289 = pnand %p286, %p288
  %p290 = pneg %p289
  %p291 = scmp.gt.s32.totalorder %s285, 8
  %p292 = por %p290, %p291
  // Predicated region
  $region22: #{tpu_custom_call.1} parent=0 // pred_check
    %p293 = pneg %p292
  $region23: #{tpu_custom_call.1} parent=0 // pred_check_branch
    %295 = sbr.rel (%p293) target = $region25
  $region24: #{tpu_custom_call.1} parent=0 // pred_region
    %v296 = vlaneseq
    %v297 = vshrl.u32 %v296, 7
    %v298 = vadd.s32 %v297, 8
    %v299 = vadd.s32 %v297, 16
    %v300 = vadd.s32 %v297, 24
    %v301 = vadd.s32 %v297, 32
    %v302 = vadd.s32 %v297, 40
    %v303 = vadd.s32 %v297, 48
    %v304 = vadd.s32 %v297, 56
    %v305 = vadd.s32 %v297, 64
    %v306 = vadd.s32 %v297, 72
    %v307 = vadd.s32 %v297, 80
    %v308 = vadd.s32 %v297, 88
    %v309 = vadd.s32 %v297, 96
    %v310 = vadd.s32 %v297, 104
    %v311 = vadd.s32 %v297, 112
    %v312 = vadd.s32 %v297, 120
    %v313 = vstv %s283
    %v314 = vadd.s32 %v297, %v313
    %v315 = vadd.s32 %v298, %v313
    %v316 = vadd.s32 %v299, %v313
    %v317 = vadd.s32 %v300, %v313
    %v318 = vadd.s32 %v301, %v313
    %v319 = vadd.s32 %v302, %v313
    %v320 = vadd.s32 %v303, %v313
    %v321 = vadd.s32 %v304, %v313
    %v322 = vadd.s32 %v305, %v313
    %v323 = vadd.s32 %v306, %v313
    %v324 = vadd.s32 %v307, %v313
    %v325 = vadd.s32 %v308, %v313
    %v326 = vadd.s32 %v309, %v313
    %v327 = vadd.s32 %v310, %v313
    %v328 = vadd.s32 %v311, %v313
    %v329 = vadd.s32 %v312, %v313
    %v330 = vlaneseq
    %v331 = vand.u32 %v330, 127
    %v332 = vstv %s284
    %v333 = vadd.s32 %v331, %v332
    %vm334 = vcmp.lt.s32.totalorder %v333, 8
    %vm335 = vcmp.ne.s32.totalorder %v314, %v333
    %vm336 = vcmp.ne.s32.totalorder %v315, %v333
    %vm337 = vcmp.ne.s32.totalorder %v316, %v333
    %vm338 = vcmp.ne.s32.totalorder %v317, %v333
    %vm339 = vcmp.ne.s32.totalorder %v318, %v333
    %vm340 = vcmp.ne.s32.totalorder %v319, %v333
    %vm341 = vcmp.ne.s32.totalorder %v320, %v333
    %vm342 = vcmp.ne.s32.totalorder %v321, %v333
    %vm343 = vcmp.ne.s32.totalorder %v322, %v333
    %vm344 = vcmp.ne.s32.totalorder %v323, %v333
    %vm345 = vcmp.ne.s32.totalorder %v324, %v333
    %vm346 = vcmp.ne.s32.totalorder %v325, %v333
    %vm347 = vcmp.ne.s32.totalorder %v326, %v333
    %vm348 = vcmp.ne.s32.totalorder %v327, %v333
    %vm349 = vcmp.ne.s32.totalorder %v328, %v333
    %vm350 = vcmp.ne.s32.totalorder %v329, %v333
    %vm351 = vmand %vm335, %vm334
    %vm352 = vmand %vm336, %vm334
    %vm353 = vmand %vm337, %vm334
    %vm354 = vmand %vm338, %vm334
    %vm355 = vmand %vm339, %vm334
    %vm356 = vmand %vm340, %vm334
    %vm357 = vmand %vm341, %vm334
    %vm358 = vmand %vm342, %vm334
    %vm359 = vmand %vm343, %vm334
    %vm360 = vmand %vm344, %vm334
    %vm361 = vmand %vm345, %vm334
    %vm362 = vmand %vm346, %vm334
    %vm363 = vmand %vm347, %vm334
    %vm364 = vmand %vm348, %vm334
    %vm365 = vmand %vm349, %vm334
    %vm366 = vmand %vm350, %vm334
    %v367 = vsel %vm334, %v221, -inf
    %v368 = vsel %vm334, %v224, -inf
    %v369 = vsel %vm334, %v229, -inf
    %v370 = vsel %vm334, %v232, -inf
    %v371 = vsel %vm334, %v237, -inf
    %v372 = vsel %vm334, %v240, -inf
    %v373 = vsel %vm334, %v245, -inf
    %v374 = vsel %vm334, %v248, -inf
    %v375 = vsel %vm334, %v253, -inf
    %v376 = vsel %vm334, %v256, -inf
    %v377 = vsel %vm334, %v261, -inf
    %v378 = vsel %vm334, %v264, -inf
    %v379 = vsel %vm334, %v269, -inf
    %v380 = vsel %vm334, %v272, -inf
    %v381 = vsel %vm334, %v277, -inf
    %v382 = vsel %vm334, %v280, -inf
    %v383 = vld [vmem:[#allocation2] sm:$0xff]
    %v384 = vld [vmem:[#allocation2 + $0x8] sm:$0xff]
    %v385 = vld [vmem:[#allocation2 + $0x10] sm:$0xff]
    %v386 = vld [vmem:[#allocation2 + $0x18] sm:$0xff]
    %v387 = vld [vmem:[#allocation2 + $0x20] sm:$0xff]
    %v388 = vld [vmem:[#allocation2 + $0x28] sm:$0xff]
    %v389 = vld [vmem:[#allocation2 + $0x30] sm:$0xff]
    %v390 = vld [vmem:[#allocation2 + $0x38] sm:$0xff]
    %v391 = vld [vmem:[#allocation2 + $0x40] sm:$0xff]
    %v392 = vld [vmem:[#allocation2 + $0x48] sm:$0xff]
    %v393 = vld [vmem:[#allocation2 + $0x50] sm:$0xff]
    %v394 = vld [vmem:[#allocation2 + $0x58] sm:$0xff]
    %v395 = vld [vmem:[#allocation2 + $0x60] sm:$0xff]
    %v396 = vld [vmem:[#allocation2 + $0x68] sm:$0xff]
    %v397 = vld [vmem:[#allocation2 + $0x70] sm:$0xff]
    %v398 = vld [vmem:[#allocation2 + $0x78] sm:$0xff]
    %399 = vmax.xlane.f32.xlu0 %v367
    %v400 = vpop.xlane.xlu0 %399
    %401 = vmax.xlane.f32.xlu0 %v368
    %v402 = vpop.xlane.xlu0 %401
    %403 = vmax.xlane.f32.xlu0 %v369
    %v404 = vpop.xlane.xlu0 %403
    %405 = vmax.xlane.f32.xlu0 %v370
    %v406 = vpop.xlane.xlu0 %405
    %407 = vmax.xlane.f32.xlu0 %v371
    %v408 = vpop.xlane.xlu0 %407
    %409 = vmax.xlane.f32.xlu0 %v372
    %v410 = vpop.xlane.xlu0 %409
    %411 = vmax.xlane.f32.xlu0 %v373
    %v412 = vpop.xlane.xlu0 %411
    %413 = vmax.xlane.f32.xlu0 %v374
    %v414 = vpop.xlane.xlu0 %413
    %415 = vmax.xlane.f32.xlu0 %v375
    %v416 = vpop.xlane.xlu0 %415
    %417 = vmax.xlane.f32.xlu0 %v376
    %v418 = vpop.xlane.xlu0 %417
    %419 = vmax.xlane.f32.xlu0 %v377
    %v420 = vpop.xlane.xlu0 %419
    %421 = vmax.xlane.f32.xlu0 %v378
    %v422 = vpop.xlane.xlu0 %421
    %423 = vmax.xlane.f32.xlu0 %v379
    %v424 = vpop.xlane.xlu0 %423
    %425 = vmax.xlane.f32.xlu0 %v380
    %v426 = vpop.xlane.xlu0 %425
    %427 = vmax.xlane.f32.xlu0 %v381
    %v428 = vpop.xlane.xlu0 %427
    %429 = vmax.xlane.f32.xlu0 %v382
    %v430 = vpop.xlane.xlu0 %429
    %v431 = vmax.f32 %v383, %v400
    %v432 = vmax.f32 %v384, %v402
    %v433 = vmax.f32 %v385, %v404
    %v434 = vmax.f32 %v386, %v406
    %v435 = vmax.f32 %v387, %v408
    %v436 = vmax.f32 %v388, %v410
    %v437 = vmax.f32 %v389, %v412
    %v438 = vmax.f32 %v390, %v414
    %v439 = vmax.f32 %v391, %v416
    %v440 = vmax.f32 %v392, %v418
    %v441 = vmax.f32 %v393, %v420
    %v442 = vmax.f32 %v394, %v422
    %v443 = vmax.f32 %v395, %v424
    %v444 = vmax.f32 %v396, %v426
    %v445 = vmax.f32 %v397, %v428
    %v446 = vmax.f32 %v398, %v430
    %448 = vset.pattern.permute.xlu0 0
    %449 = vperm.xlu0 %448, %v431
    %v450 = vpop.permute.xlu0 %449
    %453 = vset.pattern.permute.xlu0 0
    %454 = vperm.xlu0 %453, %v432
    %v455 = vpop.permute.xlu0 %454
    %458 = vset.pattern.permute.xlu0 0
    %459 = vperm.xlu0 %458, %v433
    %v460 = vpop.permute.xlu0 %459
    %463 = vset.pattern.permute.xlu0 0
    %464 = vperm.xlu0 %463, %v434
    %v465 = vpop.permute.xlu0 %464
    %468 = vset.pattern.permute.xlu0 0
    %469 = vperm.xlu0 %468, %v435
    %v470 = vpop.permute.xlu0 %469
    %473 = vset.pattern.permute.xlu0 0
    %474 = vperm.xlu0 %473, %v436
    %v475 = vpop.permute.xlu0 %474
    %478 = vset.pattern.permute.xlu0 0
    %479 = vperm.xlu0 %478, %v437
    %v480 = vpop.permute.xlu0 %479
    %483 = vset.pattern.permute.xlu0 0
    %484 = vperm.xlu0 %483, %v438
    %v485 = vpop.permute.xlu0 %484
    %488 = vset.pattern.permute.xlu0 0
    %489 = vperm.xlu0 %488, %v439
    %v490 = vpop.permute.xlu0 %489
    %493 = vset.pattern.permute.xlu0 0
    %494 = vperm.xlu0 %493, %v440
    %v495 = vpop.permute.xlu0 %494
    %498 = vset.pattern.permute.xlu0 0
    %499 = vperm.xlu0 %498, %v441
    %v500 = vpop.permute.xlu0 %499
    %503 = vset.pattern.permute.xlu0 0
    %504 = vperm.xlu0 %503, %v442
    %v505 = vpop.permute.xlu0 %504
    %508 = vset.pattern.permute.xlu0 0
    %509 = vperm.xlu0 %508, %v443
    %v510 = vpop.permute.xlu0 %509
    %513 = vset.pattern.permute.xlu0 0
    %514 = vperm.xlu0 %513, %v444
    %v515 = vpop.permute.xlu0 %514
    %518 = vset.pattern.permute.xlu0 0
    %519 = vperm.xlu0 %518, %v445
    %v520 = vpop.permute.xlu0 %519
    %523 = vset.pattern.permute.xlu0 0
    %524 = vperm.xlu0 %523, %v446
    %v525 = vpop.permute.xlu0 %524
    %v527 = vsub.f32 %v221, %v450
    %v528 = vsub.f32 %v224, %v455
    %v529 = vsub.f32 %v229, %v460
    %v530 = vsub.f32 %v232, %v465
    %v531 = vsub.f32 %v237, %v470
    %v532 = vsub.f32 %v240, %v475
    %v533 = vsub.f32 %v245, %v480
    %v534 = vsub.f32 %v248, %v485
    %v535 = vsub.f32 %v253, %v490
    %v536 = vsub.f32 %v256, %v495
    %v537 = vsub.f32 %v261, %v500
    %v538 = vsub.f32 %v264, %v505
    %v539 = vsub.f32 %v269, %v510
    %v540 = vsub.f32 %v272, %v515
    %v541 = vsub.f32 %v277, %v520
    %v542 = vsub.f32 %v280, %v525
    %v543 = vmul.f32 %v527, 1.442695
    %v544 = vpow.pop %v543
    %v545 = vmul.f32 %v528, 1.442695
    %v546 = vpow.pop %v545
    %v547 = vmul.f32 %v529, 1.442695
    %v548 = vpow.pop %v547
    %v549 = vmul.f32 %v530, 1.442695
    %v550 = vpow.pop %v549
    %v551 = vmul.f32 %v531, 1.442695
    %v552 = vpow.pop %v551
    %v553 = vmul.f32 %v532, 1.442695
    %v554 = vpow.pop %v553
    %v555 = vmul.f32 %v533, 1.442695
    %v556 = vpow.pop %v555
    %v557 = vmul.f32 %v534, 1.442695
    %v558 = vpow.pop %v557
    %v559 = vmul.f32 %v535, 1.442695
    %v560 = vpow.pop %v559
    %v561 = vmul.f32 %v536, 1.442695
    %v562 = vpow.pop %v561
    %v563 = vmul.f32 %v537, 1.442695
    %v564 = vpow.pop %v563
    %v565 = vmul.f32 %v538, 1.442695
    %v566 = vpow.pop %v565
    %v567 = vmul.f32 %v539, 1.442695
    %v568 = vpow.pop %v567
    %v569 = vmul.f32 %v540, 1.442695
    %v570 = vpow.pop %v569
    %v571 = vmul.f32 %v541, 1.442695
    %v572 = vpow.pop %v571
    %v573 = vmul.f32 %v542, 1.442695
    %v574 = vpow.pop %v573
    %v575 = vsel %vm351, %v544, 0.0
    %v576 = vsel %vm352, %v546, 0.0
    %v577 = vsel %vm353, %v548, 0.0
    %v578 = vsel %vm354, %v550, 0.0
    %v579 = vsel %vm355, %v552, 0.0
    %v580 = vsel %vm356, %v554, 0.0
    %v581 = vsel %vm357, %v556, 0.0
    %v582 = vsel %vm358, %v558, 0.0
    %v583 = vsel %vm359, %v560, 0.0
    %v584 = vsel %vm360, %v562, 0.0
    %v585 = vsel %vm361, %v564, 0.0
    %v586 = vsel %vm362, %v566, 0.0
    %v587 = vsel %vm363, %v568, 0.0
    %v588 = vsel %vm364, %v570, 0.0
    %v589 = vsel %vm365, %v572, 0.0
    %v590 = vsel %vm366, %v574, 0.0
    %v591 = vsub.f32 %v383, %v431
    %v592 = vsub.f32 %v384, %v432
    %v593 = vsub.f32 %v385, %v433
    %v594 = vsub.f32 %v386, %v434
    %v595 = vsub.f32 %v387, %v435
    %v596 = vsub.f32 %v388, %v436
    %v597 = vsub.f32 %v389, %v437
    %v598 = vsub.f32 %v390, %v438
    %v599 = vsub.f32 %v391, %v439
    %v600 = vsub.f32 %v392, %v440
    %v601 = vsub.f32 %v393, %v441
    %v602 = vsub.f32 %v394, %v442
    %v603 = vsub.f32 %v395, %v443
    %v604 = vsub.f32 %v396, %v444
    %v605 = vsub.f32 %v397, %v445
    %v606 = vsub.f32 %v398, %v446
    %v607 = vmul.f32 %v591, 1.442695
    %v608 = vpow.pop %v607
    %v609 = vmul.f32 %v592, 1.442695
    %v610 = vpow.pop %v609
    %v611 = vmul.f32 %v593, 1.442695
    %v612 = vpow.pop %v611
    %v613 = vmul.f32 %v594, 1.442695
    %v614 = vpow.pop %v613
    %v615 = vmul.f32 %v595, 1.442695
    %v616 = vpow.pop %v615
    %v617 = vmul.f32 %v596, 1.442695
    %v618 = vpow.pop %v617
    %v619 = vmul.f32 %v597, 1.442695
    %v620 = vpow.pop %v619
    %v621 = vmul.f32 %v598, 1.442695
    %v622 = vpow.pop %v621
    %v623 = vmul.f32 %v599, 1.442695
    %v624 = vpow.pop %v623
    %v625 = vmul.f32 %v600, 1.442695
    %v626 = vpow.pop %v625
    %v627 = vmul.f32 %v601, 1.442695
    %v628 = vpow.pop %v627
    %v629 = vmul.f32 %v602, 1.442695
    %v630 = vpow.pop %v629
    %v631 = vmul.f32 %v603, 1.442695
    %v632 = vpow.pop %v631
    %v633 = vmul.f32 %v604, 1.442695
    %v634 = vpow.pop %v633
    %v635 = vmul.f32 %v605, 1.442695
    %v636 = vpow.pop %v635
    %v637 = vmul.f32 %v606, 1.442695
    %v638 = vpow.pop %v637
    %v639 = vld [vmem:[#allocation3] sm:$0xff]
    %v640 = vld [vmem:[#allocation3 + $0x8] sm:$0xff]
    %v641 = vld [vmem:[#allocation3 + $0x10] sm:$0xff]
    %v642 = vld [vmem:[#allocation3 + $0x18] sm:$0xff]
    %v643 = vld [vmem:[#allocation3 + $0x20] sm:$0xff]
    %v644 = vld [vmem:[#allocation3 + $0x28] sm:$0xff]
    %v645 = vld [vmem:[#allocation3 + $0x30] sm:$0xff]
    %v646 = vld [vmem:[#allocation3 + $0x38] sm:$0xff]
    %v647 = vld [vmem:[#allocation3 + $0x40] sm:$0xff]
    %v648 = vld [vmem:[#allocation3 + $0x48] sm:$0xff]
    %v649 = vld [vmem:[#allocation3 + $0x50] sm:$0xff]
    %v650 = vld [vmem:[#allocation3 + $0x58] sm:$0xff]
    %v651 = vld [vmem:[#allocation3 + $0x60] sm:$0xff]
    %v652 = vld [vmem:[#allocation3 + $0x68] sm:$0xff]
    %v653 = vld [vmem:[#allocation3 + $0x70] sm:$0xff]
    %v654 = vld [vmem:[#allocation3 + $0x78] sm:$0xff]
    %v655 = vmul.f32 %v608, %v639
    %v656 = vmul.f32 %v610, %v640
    %v657 = vmul.f32 %v612, %v641
    %v658 = vmul.f32 %v614, %v642
    %v659 = vmul.f32 %v616, %v643
    %v660 = vmul.f32 %v618, %v644
    %v661 = vmul.f32 %v620, %v645
    %v662 = vmul.f32 %v622, %v646
    %v663 = vmul.f32 %v624, %v647
    %v664 = vmul.f32 %v626, %v648
    %v665 = vmul.f32 %v628, %v649
    %v666 = vmul.f32 %v630, %v650
    %v667 = vmul.f32 %v632, %v651
    %v668 = vmul.f32 %v634, %v652
    %v669 = vmul.f32 %v636, %v653
    %v670 = vmul.f32 %v638, %v654
    %671 = vadd.xlane.f32.xlu0 %v575
    %v672 = vpop.xlane.xlu0 %671
    %673 = vadd.xlane.f32.xlu0 %v576
    %v674 = vpop.xlane.xlu0 %673
    %675 = vadd.xlane.f32.xlu0 %v577
    %v676 = vpop.xlane.xlu0 %675
    %677 = vadd.xlane.f32.xlu0 %v578
    %v678 = vpop.xlane.xlu0 %677
    %679 = vadd.xlane.f32.xlu0 %v579
    %v680 = vpop.xlane.xlu0 %679
    %681 = vadd.xlane.f32.xlu0 %v580
    %v682 = vpop.xlane.xlu0 %681
    %683 = vadd.xlane.f32.xlu0 %v581
    %v684 = vpop.xlane.xlu0 %683
    %685 = vadd.xlane.f32.xlu0 %v582
    %v686 = vpop.xlane.xlu0 %685
    %687 = vadd.xlane.f32.xlu0 %v583
    %v688 = vpop.xlane.xlu0 %687
    %689 = vadd.xlane.f32.xlu0 %v584
    %v690 = vpop.xlane.xlu0 %689
    %691 = vadd.xlane.f32.xlu0 %v585
    %v692 = vpop.xlane.xlu0 %691
    %693 = vadd.xlane.f32.xlu0 %v586
    %v694 = vpop.xlane.xlu0 %693
    %695 = vadd.xlane.f32.xlu0 %v587
    %v696 = vpop.xlane.xlu0 %695
    %697 = vadd.xlane.f32.xlu0 %v588
    %v698 = vpop.xlane.xlu0 %697
    %699 = vadd.xlane.f32.xlu0 %v589
    %v700 = vpop.xlane.xlu0 %699
    %701 = vadd.xlane.f32.xlu0 %v590
    %v702 = vpop.xlane.xlu0 %701
    %v703 = vadd.f32 %v655, %v672
    %v704 = vadd.f32 %v656, %v674
    %v705 = vadd.f32 %v657, %v676
    %v706 = vadd.f32 %v658, %v678
    %v707 = vadd.f32 %v659, %v680
    %v708 = vadd.f32 %v660, %v682
    %v709 = vadd.f32 %v661, %v684
    %v710 = vadd.f32 %v662, %v686
    %v711 = vadd.f32 %v663, %v688
    %v712 = vadd.f32 %v664, %v690
    %v713 = vadd.f32 %v665, %v692
    %v714 = vadd.f32 %v666, %v694
    %v715 = vadd.f32 %v667, %v696
    %v716 = vadd.f32 %v668, %v698
    %v717 = vadd.f32 %v669, %v700
    %v718 = vadd.f32 %v670, %v702
    %vm719 = vcmask 7168
    %720 = vst.msk [vmem:[#allocation3] sm:$0xff] %vm719, %v703
    %721 = vst.msk [vmem:[#allocation3 + $0x8] sm:$0xff] %vm719, %v704
    %722 = vst.msk [vmem:[#allocation3 + $0x10] sm:$0xff] %vm719, %v705
    %723 = vst.msk [vmem:[#allocation3 + $0x18] sm:$0xff] %vm719, %v706
    %724 = vst.msk [vmem:[#allocation3 + $0x20] sm:$0xff] %vm719, %v707
    %725 = vst.msk [vmem:[#allocation3 + $0x28] sm:$0xff] %vm719, %v708
    %726 = vst.msk [vmem:[#allocation3 + $0x30] sm:$0xff] %vm719, %v709
    %727 = vst.msk [vmem:[#allocation3 + $0x38] sm:$0xff] %vm719, %v710
    %728 = vst.msk [vmem:[#allocation3 + $0x40] sm:$0xff] %vm719, %v711
    %729 = vst.msk [vmem:[#allocation3 + $0x48] sm:$0xff] %vm719, %v712
    %730 = vst.msk [vmem:[#allocation3 + $0x50] sm:$0xff] %vm719, %v713
    %731 = vst.msk [vmem:[#allocation3 + $0x58] sm:$0xff] %vm719, %v714
    %732 = vst.msk [vmem:[#allocation3 + $0x60] sm:$0xff] %vm719, %v715
    %733 = vst.msk [vmem:[#allocation3 + $0x68] sm:$0xff] %vm719, %v716
    %734 = vst.msk [vmem:[#allocation3 + $0x70] sm:$0xff] %vm719, %v717
    %735 = vst.msk [vmem:[#allocation3 + $0x78] sm:$0xff] %vm719, %v718
    %736 = vst.msk [vmem:[#allocation2] sm:$0xff] %vm719, %v431
    %737 = vst.msk [vmem:[#allocation2 + $0x8] sm:$0xff] %vm719, %v432
    %738 = vst.msk [vmem:[#allocation2 + $0x10] sm:$0xff] %vm719, %v433
    %739 = vst.msk [vmem:[#allocation2 + $0x18] sm:$0xff] %vm719, %v434
    %740 = vst.msk [vmem:[#allocation2 + $0x20] sm:$0xff] %vm719, %v435
    %741 = vst.msk [vmem:[#allocation2 + $0x28] sm:$0xff] %vm719, %v436
    %742 = vst.msk [vmem:[#allocation2 + $0x30] sm:$0xff] %vm719, %v437
    %743 = vst.msk [vmem:[#allocation2 + $0x38] sm:$0xff] %vm719, %v438
    %744 = vst.msk [vmem:[#allocation2 + $0x40] sm:$0xff] %vm719, %v439
    %745 = vst.msk [vmem:[#allocation2 + $0x48] sm:$0xff] %vm719, %v440
    %746 = vst.msk [vmem:[#allocation2 + $0x50] sm:$0xff] %vm719, %v441
    %747 = vst.msk [vmem:[#allocation2 + $0x58] sm:$0xff] %vm719, %v442
    %748 = vst.msk [vmem:[#allocation2 + $0x60] sm:$0xff] %vm719, %v443
    %749 = vst.msk [vmem:[#allocation2 + $0x68] sm:$0xff] %vm719, %v444
    %750 = vst.msk [vmem:[#allocation2 + $0x70] sm:$0xff] %vm719, %v445
    %751 = vst.msk [vmem:[#allocation2 + $0x78] sm:$0xff] %vm719, %v446
  $region25: #{tpu_custom_call.1} parent=0 // pred_fallthru
    _
  %p752 = pneg %p292
  // Predicated region
  $region26: #{tpu_custom_call.1} parent=0 // pred_check
    _
  $region27: #{tpu_custom_call.1} parent=0 // pred_check_branch
    %754 = sbr.rel (%p292) target = $region29
  $region28: #{tpu_custom_call.1} parent=0 // pred_region
    %v755 = vld [vmem:[#allocation2] sm:$0xff]
    %v756 = vld [vmem:[#allocation2 + $0x8] sm:$0xff]
    %v757 = vld [vmem:[#allocation2 + $0x10] sm:$0xff]
    %v758 = vld [vmem:[#allocation2 + $0x18] sm:$0xff]
    %v759 = vld [vmem:[#allocation2 + $0x20] sm:$0xff]
    %v760 = vld [vmem:[#allocation2 + $0x28] sm:$0xff]
    %v761 = vld [vmem:[#allocation2 + $0x30] sm:$0xff]
    %v762 = vld [vmem:[#allocation2 + $0x38] sm:$0xff]
    %v763 = vld [vmem:[#allocation2 + $0x40] sm:$0xff]
    %v764 = vld [vmem:[#allocation2 + $0x48] sm:$0xff]
    %v765 = vld [vmem:[#allocation2 + $0x50] sm:$0xff]
    %v766 = vld [vmem:[#allocation2 + $0x58] sm:$0xff]
    %v767 = vld [vmem:[#allocation2 + $0x60] sm:$0xff]
    %v768 = vld [vmem:[#allocation2 + $0x68] sm:$0xff]
    %v769 = vld [vmem:[#allocation2 + $0x70] sm:$0xff]
    %v770 = vld [vmem:[#allocation2 + $0x78] sm:$0xff]
    %771 = vmax.xlane.f32.xlu0 %v221
    %v772 = vpop.xlane.xlu0 %771
    %773 = vmax.xlane.f32.xlu0 %v224
    %v774 = vpop.xlane.xlu0 %773
    %775 = vmax.xlane.f32.xlu0 %v229
    %v776 = vpop.xlane.xlu0 %775
    %777 = vmax.xlane.f32.xlu0 %v232
    %v778 = vpop.xlane.xlu0 %777
    %779 = vmax.xlane.f32.xlu0 %v237
    %v780 = vpop.xlane.xlu0 %779
    %781 = vmax.xlane.f32.xlu0 %v240
    %v782 = vpop.xlane.xlu0 %781
    %783 = vmax.xlane.f32.xlu0 %v245
    %v784 = vpop.xlane.xlu0 %783
    %785 = vmax.xlane.f32.xlu0 %v248
    %v786 = vpop.xlane.xlu0 %785
    %787 = vmax.xlane.f32.xlu0 %v253
    %v788 = vpop.xlane.xlu0 %787
    %789 = vmax.xlane.f32.xlu0 %v256
    %v790 = vpop.xlane.xlu0 %789
    %791 = vmax.xlane.f32.xlu0 %v261
    %v792 = vpop.xlane.xlu0 %791
    %793 = vmax.xlane.f32.xlu0 %v264
    %v794 = vpop.xlane.xlu0 %793
    %795 = vmax.xlane.f32.xlu0 %v269
    %v796 = vpop.xlane.xlu0 %795
    %797 = vmax.xlane.f32.xlu0 %v272
    %v798 = vpop.xlane.xlu0 %797
    %799 = vmax.xlane.f32.xlu0 %v277
    %v800 = vpop.xlane.xlu0 %799
    %801 = vmax.xlane.f32.xlu0 %v280
    %v802 = vpop.xlane.xlu0 %801
    %v803 = vmax.f32 %v755, %v772
    %v804 = vmax.f32 %v756, %v774
    %v805 = vmax.f32 %v757, %v776
    %v806 = vmax.f32 %v758, %v778
    %v807 = vmax.f32 %v759, %v780
    %v808 = vmax.f32 %v760, %v782
    %v809 = vmax.f32 %v761, %v784
    %v810 = vmax.f32 %v762, %v786
    %v811 = vmax.f32 %v763, %v788
    %v812 = vmax.f32 %v764, %v790
    %v813 = vmax.f32 %v765, %v792
    %v814 = vmax.f32 %v766, %v794
    %v815 = vmax.f32 %v767, %v796
    %v816 = vmax.f32 %v768, %v798
    %v817 = vmax.f32 %v769, %v800
    %v818 = vmax.f32 %v770, %v802
    %820 = vset.pattern.permute.xlu0 0
    %821 = vperm.xlu0 %820, %v803
    %v822 = vpop.permute.xlu0 %821
    %825 = vset.pattern.permute.xlu0 0
    %826 = vperm.xlu0 %825, %v804
    %v827 = vpop.permute.xlu0 %826
    %830 = vset.pattern.permute.xlu0 0
    %831 = vperm.xlu0 %830, %v805
    %v832 = vpop.permute.xlu0 %831
    %835 = vset.pattern.permute.xlu0 0
    %836 = vperm.xlu0 %835, %v806
    %v837 = vpop.permute.xlu0 %836
    %840 = vset.pattern.permute.xlu0 0
    %841 = vperm.xlu0 %840, %v807
    %v842 = vpop.permute.xlu0 %841
    %845 = vset.pattern.permute.xlu0 0
    %846 = vperm.xlu0 %845, %v808
    %v847 = vpop.permute.xlu0 %846
    %850 = vset.pattern.permute.xlu0 0
    %851 = vperm.xlu0 %850, %v809
    %v852 = vpop.permute.xlu0 %851
    %855 = vset.pattern.permute.xlu0 0
    %856 = vperm.xlu0 %855, %v810
    %v857 = vpop.permute.xlu0 %856
    %860 = vset.pattern.permute.xlu0 0
    %861 = vperm.xlu0 %860, %v811
    %v862 = vpop.permute.xlu0 %861
    %865 = vset.pattern.permute.xlu0 0
    %866 = vperm.xlu0 %865, %v812
    %v867 = vpop.permute.xlu0 %866
    %870 = vset.pattern.permute.xlu0 0
    %871 = vperm.xlu0 %870, %v813
    %v872 = vpop.permute.xlu0 %871
    %875 = vset.pattern.permute.xlu0 0
    %876 = vperm.xlu0 %875, %v814
    %v877 = vpop.permute.xlu0 %876
    %880 = vset.pattern.permute.xlu0 0
    %881 = vperm.xlu0 %880, %v815
    %v882 = vpop.permute.xlu0 %881
    %885 = vset.pattern.permute.xlu0 0
    %886 = vperm.xlu0 %885, %v816
    %v887 = vpop.permute.xlu0 %886
    %890 = vset.pattern.permute.xlu0 0
    %891 = vperm.xlu0 %890, %v817
    %v892 = vpop.permute.xlu0 %891
    %895 = vset.pattern.permute.xlu0 0
    %896 = vperm.xlu0 %895, %v818
    %v897 = vpop.permute.xlu0 %896
    %v899 = vsub.f32 %v221, %v822
    %v900 = vsub.f32 %v224, %v827
    %v901 = vsub.f32 %v229, %v832
    %v902 = vsub.f32 %v232, %v837
    %v903 = vsub.f32 %v237, %v842
    %v904 = vsub.f32 %v240, %v847
    %v905 = vsub.f32 %v245, %v852
    %v906 = vsub.f32 %v248, %v857
    %v907 = vsub.f32 %v253, %v862
    %v908 = vsub.f32 %v256, %v867
    %v909 = vsub.f32 %v261, %v872
    %v910 = vsub.f32 %v264, %v877
    %v911 = vsub.f32 %v269, %v882
    %v912 = vsub.f32 %v272, %v887
    %v913 = vsub.f32 %v277, %v892
    %v914 = vsub.f32 %v280, %v897
    %v915 = vmul.f32 %v899, 1.442695
    %v916 = vpow.pop %v915
    %v917 = vmul.f32 %v900, 1.442695
    %v918 = vpow.pop %v917
    %v919 = vmul.f32 %v901, 1.442695
    %v920 = vpow.pop %v919
    %v921 = vmul.f32 %v902, 1.442695
    %v922 = vpow.pop %v921
    %v923 = vmul.f32 %v903, 1.442695
    %v924 = vpow.pop %v923
    %v925 = vmul.f32 %v904, 1.442695
    %v926 = vpow.pop %v925
    %v927 = vmul.f32 %v905, 1.442695
    %v928 = vpow.pop %v927
    %v929 = vmul.f32 %v906, 1.442695
    %v930 = vpow.pop %v929
    %v931 = vmul.f32 %v907, 1.442695
    %v932 = vpow.pop %v931
    %v933 = vmul.f32 %v908, 1.442695
    %v934 = vpow.pop %v933
    %v935 = vmul.f32 %v909, 1.442695
    %v936 = vpow.pop %v935
    %v937 = vmul.f32 %v910, 1.442695
    %v938 = vpow.pop %v937
    %v939 = vmul.f32 %v911, 1.442695
    %v940 = vpow.pop %v939
    %v941 = vmul.f32 %v912, 1.442695
    %v942 = vpow.pop %v941
    %v943 = vmul.f32 %v913, 1.442695
    %v944 = vpow.pop %v943
    %v945 = vmul.f32 %v914, 1.442695
    %v946 = vpow.pop %v945
    %v947 = vsub.f32 %v755, %v803
    %v948 = vsub.f32 %v756, %v804
    %v949 = vsub.f32 %v757, %v805
    %v950 = vsub.f32 %v758, %v806
    %v951 = vsub.f32 %v759, %v807
    %v952 = vsub.f32 %v760, %v808
    %v953 = vsub.f32 %v761, %v809
    %v954 = vsub.f32 %v762, %v810
    %v955 = vsub.f32 %v763, %v811
    %v956 = vsub.f32 %v764, %v812
    %v957 = vsub.f32 %v765, %v813
    %v958 = vsub.f32 %v766, %v814
    %v959 = vsub.f32 %v767, %v815
    %v960 = vsub.f32 %v768, %v816
    %v961 = vsub.f32 %v769, %v817
    %v962 = vsub.f32 %v770, %v818
    %v963 = vmul.f32 %v947, 1.442695
    %v964 = vpow.pop %v963
    %v965 = vmul.f32 %v948, 1.442695
    %v966 = vpow.pop %v965
    %v967 = vmul.f32 %v949, 1.442695
    %v968 = vpow.pop %v967
    %v969 = vmul.f32 %v950, 1.442695
    %v970 = vpow.pop %v969
    %v971 = vmul.f32 %v951, 1.442695
    %v972 = vpow.pop %v971
    %v973 = vmul.f32 %v952, 1.442695
    %v974 = vpow.pop %v973
    %v975 = vmul.f32 %v953, 1.442695
    %v976 = vpow.pop %v975
    %v977 = vmul.f32 %v954, 1.442695
    %v978 = vpow.pop %v977
    %v979 = vmul.f32 %v955, 1.442695
    %v980 = vpow.pop %v979
    %v981 = vmul.f32 %v956, 1.442695
    %v982 = vpow.pop %v981
    %v983 = vmul.f32 %v957, 1.442695
    %v984 = vpow.pop %v983
    %v985 = vmul.f32 %v958, 1.442695
    %v986 = vpow.pop %v985
    %v987 = vmul.f32 %v959, 1.442695
    %v988 = vpow.pop %v987
    %v989 = vmul.f32 %v960, 1.442695
    %v990 = vpow.pop %v989
    %v991 = vmul.f32 %v961, 1.442695
    %v992 = vpow.pop %v991
    %v993 = vmul.f32 %v962, 1.442695
    %v994 = vpow.pop %v993
    %v995 = vld [vmem:[#allocation3] sm:$0xff]
    %v996 = vld [vmem:[#allocation3 + $0x8] sm:$0xff]
    %v997 = vld [vmem:[#allocation3 + $0x10] sm:$0xff]
    %v998 = vld [vmem:[#allocation3 + $0x18] sm:$0xff]
    %v999 = vld [vmem:[#allocation3 + $0x20] sm:$0xff]
    %v1000 = vld [vmem:[#allocation3 + $0x28] sm:$0xff]
    %v1001 = vld [vmem:[#allocation3 + $0x30] sm:$0xff]
    %v1002 = vld [vmem:[#allocation3 + $0x38] sm:$0xff]
    %v1003 = vld [vmem:[#allocation3 + $0x40] sm:$0xff]
    %v1004 = vld [vmem:[#allocation3 + $0x48] sm:$0xff]
    %v1005 = vld [vmem:[#allocation3 + $0x50] sm:$0xff]
    %v1006 = vld [vmem:[#allocation3 + $0x58] sm:$0xff]
    %v1007 = vld [vmem:[#allocation3 + $0x60] sm:$0xff]
    %v1008 = vld [vmem:[#allocation3 + $0x68] sm:$0xff]
    %v1009 = vld [vmem:[#allocation3 + $0x70] sm:$0xff]
    %v1010 = vld [vmem:[#allocation3 + $0x78] sm:$0xff]
    %v1011 = vmul.f32 %v964, %v995
    %v1012 = vmul.f32 %v966, %v996
    %v1013 = vmul.f32 %v968, %v997
    %v1014 = vmul.f32 %v970, %v998
    %v1015 = vmul.f32 %v972, %v999
    %v1016 = vmul.f32 %v974, %v1000
    %v1017 = vmul.f32 %v976, %v1001
    %v1018 = vmul.f32 %v978, %v1002
    %v1019 = vmul.f32 %v980, %v1003
    %v1020 = vmul.f32 %v982, %v1004
    %v1021 = vmul.f32 %v984, %v1005
    %v1022 = vmul.f32 %v986, %v1006
    %v1023 = vmul.f32 %v988, %v1007
    %v1024 = vmul.f32 %v990, %v1008
    %v1025 = vmul.f32 %v992, %v1009
    %v1026 = vmul.f32 %v994, %v1010
    %1027 = vadd.xlane.f32.xlu0 %v916
    %v1028 = vpop.xlane.xlu0 %1027
    %1029 = vadd.xlane.f32.xlu0 %v918
    %v1030 = vpop.xlane.xlu0 %1029
    %1031 = vadd.xlane.f32.xlu0 %v920
    %v1032 = vpop.xlane.xlu0 %1031
    %1033 = vadd.xlane.f32.xlu0 %v922
    %v1034 = vpop.xlane.xlu0 %1033
    %1035 = vadd.xlane.f32.xlu0 %v924
    %v1036 = vpop.xlane.xlu0 %1035
    %1037 = vadd.xlane.f32.xlu0 %v926
    %v1038 = vpop.xlane.xlu0 %1037
    %1039 = vadd.xlane.f32.xlu0 %v928
    %v1040 = vpop.xlane.xlu0 %1039
    %1041 = vadd.xlane.f32.xlu0 %v930
    %v1042 = vpop.xlane.xlu0 %1041
    %1043 = vadd.xlane.f32.xlu0 %v932
    %v1044 = vpop.xlane.xlu0 %1043
    %1045 = vadd.xlane.f32.xlu0 %v934
    %v1046 = vpop.xlane.xlu0 %1045
    %1047 = vadd.xlane.f32.xlu0 %v936
    %v1048 = vpop.xlane.xlu0 %1047
    %1049 = vadd.xlane.f32.xlu0 %v938
    %v1050 = vpop.xlane.xlu0 %1049
    %1051 = vadd.xlane.f32.xlu0 %v940
    %v1052 = vpop.xlane.xlu0 %1051
    %1053 = vadd.xlane.f32.xlu0 %v942
    %v1054 = vpop.xlane.xlu0 %1053
    %1055 = vadd.xlane.f32.xlu0 %v944
    %v1056 = vpop.xlane.xlu0 %1055
    %1057 = vadd.xlane.f32.xlu0 %v946
    %v1058 = vpop.xlane.xlu0 %1057
    %v1059 = vadd.f32 %v1011, %v1028
    %v1060 = vadd.f32 %v1012, %v1030
    %v1061 = vadd.f32 %v1013, %v1032
    %v1062 = vadd.f32 %v1014, %v1034
    %v1063 = vadd.f32 %v1015, %v1036
    %v1064 = vadd.f32 %v1016, %v1038
    %v1065 = vadd.f32 %v1017, %v1040
    %v1066 = vadd.f32 %v1018, %v1042
    %v1067 = vadd.f32 %v1019, %v1044
    %v1068 = vadd.f32 %v1020, %v1046
    %v1069 = vadd.f32 %v1021, %v1048
    %v1070 = vadd.f32 %v1022, %v1050
    %v1071 = vadd.f32 %v1023, %v1052
    %v1072 = vadd.f32 %v1024, %v1054
    %v1073 = vadd.f32 %v1025, %v1056
    %v1074 = vadd.f32 %v1026, %v1058
    %vm1075 = vcmask 7168
    %1076 = vst.msk [vmem:[#allocation3] sm:$0xff] %vm1075, %v1059
    %1077 = vst.msk [vmem:[#allocation3 + $0x8] sm:$0xff] %vm1075, %v1060
    %1078 = vst.msk [vmem:[#allocation3 + $0x10] sm:$0xff] %vm1075, %v1061
    %1079 = vst.msk [vmem:[#allocation3 + $0x18] sm:$0xff] %vm1075, %v1062
    %1080 = vst.msk [vmem:[#allocation3 + $0x20] sm:$0xff] %vm1075, %v1063
    %1081 = vst.msk [vmem:[#allocation3 + $0x28] sm:$0xff] %vm1075, %v1064
    %1082 = vst.msk [vmem:[#allocation3 + $0x30] sm:$0xff] %vm1075, %v1065
    %1083 = vst.msk [vmem:[#allocation3 + $0x38] sm:$0xff] %vm1075, %v1066
    %1084 = vst.msk [vmem:[#allocation3 + $0x40] sm:$0xff] %vm1075, %v1067
    %1085 = vst.msk [vmem:[#allocation3 + $0x48] sm:$0xff] %vm1075, %v1068
    %1086 = vst.msk [vmem:[#allocation3 + $0x50] sm:$0xff] %vm1075, %v1069
    %1087 = vst.msk [vmem:[#allocation3 + $0x58] sm:$0xff] %vm1075, %v1070
    %1088 = vst.msk [vmem:[#allocation3 + $0x60] sm:$0xff] %vm1075, %v1071
    %1089 = vst.msk [vmem:[#allocation3 + $0x68] sm:$0xff] %vm1075, %v1072
    %1090 = vst.msk [vmem:[#allocation3 + $0x70] sm:$0xff] %vm1075, %v1073
    %1091 = vst.msk [vmem:[#allocation3 + $0x78] sm:$0xff] %vm1075, %v1074
    %1092 = vst.msk [vmem:[#allocation2] sm:$0xff] %vm1075, %v803
    %1093 = vst.msk [vmem:[#allocation2 + $0x8] sm:$0xff] %vm1075, %v804
    %1094 = vst.msk [vmem:[#allocation2 + $0x10] sm:$0xff] %vm1075, %v805
    %1095 = vst.msk [vmem:[#allocation2 + $0x18] sm:$0xff] %vm1075, %v806
    %1096 = vst.msk [vmem:[#allocation2 + $0x20] sm:$0xff] %vm1075, %v807
    %1097 = vst.msk [vmem:[#allocation2 + $0x28] sm:$0xff] %vm1075, %v808
    %1098 = vst.msk [vmem:[#allocation2 + $0x30] sm:$0xff] %vm1075, %v809
    %1099 = vst.msk [vmem:[#allocation2 + $0x38] sm:$0xff] %vm1075, %v810
    %1100 = vst.msk [vmem:[#allocation2 + $0x40] sm:$0xff] %vm1075, %v811
    %1101 = vst.msk [vmem:[#allocation2 + $0x48] sm:$0xff] %vm1075, %v812
    %1102 = vst.msk [vmem:[#allocation2 + $0x50] sm:$0xff] %vm1075, %v813
    %1103 = vst.msk [vmem:[#allocation2 + $0x58] sm:$0xff] %vm1075, %v814
    %1104 = vst.msk [vmem:[#allocation2 + $0x60] sm:$0xff] %vm1075, %v815
    %1105 = vst.msk [vmem:[#allocation2 + $0x68] sm:$0xff] %vm1075, %v816
    %1106 = vst.msk [vmem:[#allocation2 + $0x70] sm:$0xff] %vm1075, %v817
    %1107 = vst.msk [vmem:[#allocation2 + $0x78] sm:$0xff] %vm1075, %v818
  $region29: #{tpu_custom_call.1} parent=0 // pred_fallthru
    _
  // Predicated region
  $region30: #{tpu_custom_call.1} parent=0 // pred_check
    %p1108 = pneg %p18
  $region31: #{tpu_custom_call.1} parent=0 // pred_check_branch
    %1110 = sbr.rel (%p1108) target = $region33
  $region32: #{tpu_custom_call.1} parent=0 // pred_region
    %v1111 = vld [vmem:[#allocation2] sm:$0xff]
    %v1112 = vld [vmem:[#allocation2 + $0x8] sm:$0xff]
    %v1113 = vld [vmem:[#allocation2 + $0x10] sm:$0xff]
    %v1114 = vld [vmem:[#allocation2 + $0x18] sm:$0xff]
    %v1115 = vld [vmem:[#allocation2 + $0x20] sm:$0xff]
    %v1116 = vld [vmem:[#allocation2 + $0x28] sm:$0xff]
    %v1117 = vld [vmem:[#allocation2 + $0x30] sm:$0xff]
    %v1118 = vld [vmem:[#allocation2 + $0x38] sm:$0xff]
    %v1119 = vld [vmem:[#allocation2 + $0x40] sm:$0xff]
    %v1120 = vld [vmem:[#allocation2 + $0x48] sm:$0xff]
    %v1121 = vld [vmem:[#allocation2 + $0x50] sm:$0xff]
    %v1122 = vld [vmem:[#allocation2 + $0x58] sm:$0xff]
    %v1123 = vld [vmem:[#allocation2 + $0x60] sm:$0xff]
    %v1124 = vld [vmem:[#allocation2 + $0x68] sm:$0xff]
    %v1125 = vld [vmem:[#allocation2 + $0x70] sm:$0xff]
    %v1126 = vld [vmem:[#allocation2 + $0x78] sm:$0xff]
    %v1127 = vld [vmem:[#allocation3] sm:$0xff]
    %v1128 = vld [vmem:[#allocation3 + $0x8] sm:$0xff]
    %v1129 = vld [vmem:[#allocation3 + $0x10] sm:$0xff]
    %v1130 = vld [vmem:[#allocation3 + $0x18] sm:$0xff]
    %v1131 = vld [vmem:[#allocation3 + $0x20] sm:$0xff]
    %v1132 = vld [vmem:[#allocation3 + $0x28] sm:$0xff]
    %v1133 = vld [vmem:[#allocation3 + $0x30] sm:$0xff]
    %v1134 = vld [vmem:[#allocation3 + $0x38] sm:$0xff]
    %v1135 = vld [vmem:[#allocation3 + $0x40] sm:$0xff]
    %v1136 = vld [vmem:[#allocation3 + $0x48] sm:$0xff]
    %v1137 = vld [vmem:[#allocation3 + $0x50] sm:$0xff]
    %v1138 = vld [vmem:[#allocation3 + $0x58] sm:$0xff]
    %v1139 = vld [vmem:[#allocation3 + $0x60] sm:$0xff]
    %v1140 = vld [vmem:[#allocation3 + $0x68] sm:$0xff]
    %v1141 = vld [vmem:[#allocation3 + $0x70] sm:$0xff]
    %v1142 = vld [vmem:[#allocation3 + $0x78] sm:$0xff]
    %v1143 = vlog2.pop %v1127
    %v1144 = vmul.f32 %v1143, 0.6931472
    %v1145 = vlog2.pop %v1128
    %v1146 = vmul.f32 %v1145, 0.6931472
    %v1147 = vlog2.pop %v1129
    %v1148 = vmul.f32 %v1147, 0.6931472
    %v1149 = vlog2.pop %v1130
    %v1150 = vmul.f32 %v1149, 0.6931472
    %v1151 = vlog2.pop %v1131
    %v1152 = vmul.f32 %v1151, 0.6931472
    %v1153 = vlog2.pop %v1132
    %v1154 = vmul.f32 %v1153, 0.6931472
    %v1155 = vlog2.pop %v1133
    %v1156 = vmul.f32 %v1155, 0.6931472
    %v1157 = vlog2.pop %v1134
    %v1158 = vmul.f32 %v1157, 0.6931472
    %v1159 = vlog2.pop %v1135
    %v1160 = vmul.f32 %v1159, 0.6931472
    %v1161 = vlog2.pop %v1136
    %v1162 = vmul.f32 %v1161, 0.6931472
    %v1163 = vlog2.pop %v1137
    %v1164 = vmul.f32 %v1163, 0.6931472
    %v1165 = vlog2.pop %v1138
    %v1166 = vmul.f32 %v1165, 0.6931472
    %v1167 = vlog2.pop %v1139
    %v1168 = vmul.f32 %v1167, 0.6931472
    %v1169 = vlog2.pop %v1140
    %v1170 = vmul.f32 %v1169, 0.6931472
    %v1171 = vlog2.pop %v1141
    %v1172 = vmul.f32 %v1171, 0.6931472
    %v1173 = vlog2.pop %v1142
    %v1174 = vmul.f32 %v1173, 0.6931472
    %v1175 = vadd.f32 %v1111, %v1144
    %v1176 = vadd.f32 %v1112, %v1146
    %v1177 = vadd.f32 %v1113, %v1148
    %v1178 = vadd.f32 %v1114, %v1150
    %v1179 = vadd.f32 %v1115, %v1152
    %v1180 = vadd.f32 %v1116, %v1154
    %v1181 = vadd.f32 %v1117, %v1156
    %v1182 = vadd.f32 %v1118, %v1158
    %v1183 = vadd.f32 %v1119, %v1160
    %v1184 = vadd.f32 %v1120, %v1162
    %v1185 = vadd.f32 %v1121, %v1164
    %v1186 = vadd.f32 %v1122, %v1166
    %v1187 = vadd.f32 %v1123, %v1168
    %v1188 = vadd.f32 %v1124, %v1170
    %v1189 = vadd.f32 %v1125, %v1172
    %v1190 = vadd.f32 %v1126, %v1174
    %v1191 = vld [vmem:[%s2] sm:$0xff]
    %v1192 = vld [vmem:[%s2 + $0x8] sm:$0xff]
    %v1193 = vld [vmem:[%s2 + $0x10] sm:$0xff]
    %v1194 = vld [vmem:[%s2 + $0x18] sm:$0xff]
    %v1195 = vld [vmem:[%s2 + $0x20] sm:$0xff]
    %v1196 = vld [vmem:[%s2 + $0x28] sm:$0xff]
    %v1197 = vld [vmem:[%s2 + $0x30] sm:$0xff]
    %v1198 = vld [vmem:[%s2 + $0x38] sm:$0xff]
    %v1199 = vld [vmem:[%s2 + $0x40] sm:$0xff]
    %v1200 = vld [vmem:[%s2 + $0x48] sm:$0xff]
    %v1201 = vld [vmem:[%s2 + $0x50] sm:$0xff]
    %v1202 = vld [vmem:[%s2 + $0x58] sm:$0xff]
    %v1203 = vld [vmem:[%s2 + $0x60] sm:$0xff]
    %v1204 = vld [vmem:[%s2 + $0x68] sm:$0xff]
    %v1205 = vld [vmem:[%s2 + $0x70] sm:$0xff]
    %v1206 = vld [vmem:[%s2 + $0x78] sm:$0xff]
    %v1207 = vld [vmem:[%s3] sm:$0xff]
    %v1208 = vld [vmem:[%s3 + $0x8] sm:$0xff]
    %v1209 = vld [vmem:[%s3 + $0x10] sm:$0xff]
    %v1210 = vld [vmem:[%s3 + $0x18] sm:$0xff]
    %v1211 = vld [vmem:[%s3 + $0x20] sm:$0xff]
    %v1212 = vld [vmem:[%s3 + $0x28] sm:$0xff]
    %v1213 = vld [vmem:[%s3 + $0x30] sm:$0xff]
    %v1214 = vld [vmem:[%s3 + $0x38] sm:$0xff]
    %v1215 = vld [vmem:[%s3 + $0x40] sm:$0xff]
    %v1216 = vld [vmem:[%s3 + $0x48] sm:$0xff]
    %v1217 = vld [vmem:[%s3 + $0x50] sm:$0xff]
    %v1218 = vld [vmem:[%s3 + $0x58] sm:$0xff]
    %v1219 = vld [vmem:[%s3 + $0x60] sm:$0xff]
    %v1220 = vld [vmem:[%s3 + $0x68] sm:$0xff]
    %v1221 = vld [vmem:[%s3 + $0x70] sm:$0xff]
    %v1222 = vld [vmem:[%s3 + $0x78] sm:$0xff]
    %v1223 = vrcp.pop %v1207
    %v1224 = vmul.f32 %v1191, %v1223
    %v1225 = vrcp.pop %v1208
    %v1226 = vmul.f32 %v1192, %v1225
    %v1227 = vrcp.pop %v1209
    %v1228 = vmul.f32 %v1193, %v1227
    %v1229 = vrcp.pop %v1210
    %v1230 = vmul.f32 %v1194, %v1229
    %v1231 = vrcp.pop %v1211
    %v1232 = vmul.f32 %v1195, %v1231
    %v1233 = vrcp.pop %v1212
    %v1234 = vmul.f32 %v1196, %v1233
    %v1235 = vrcp.pop %v1213
    %v1236 = vmul.f32 %v1197, %v1235
    %v1237 = vrcp.pop %v1214
    %v1238 = vmul.f32 %v1198, %v1237
    %v1239 = vrcp.pop %v1215
    %v1240 = vmul.f32 %v1199, %v1239
    %v1241 = vrcp.pop %v1216
    %v1242 = vmul.f32 %v1200, %v1241
    %v1243 = vrcp.pop %v1217
    %v1244 = vmul.f32 %v1201, %v1243
    %v1245 = vrcp.pop %v1218
    %v1246 = vmul.f32 %v1202, %v1245
    %v1247 = vrcp.pop %v1219
    %v1248 = vmul.f32 %v1203, %v1247
    %v1249 = vrcp.pop %v1220
    %v1250 = vmul.f32 %v1204, %v1249
    %v1251 = vrcp.pop %v1221
    %v1252 = vmul.f32 %v1205, %v1251
    %v1253 = vrcp.pop %v1222
    %v1254 = vmul.f32 %v1206, %v1253
    %v1255 = vsub.f32 %v1224, %v1175
    %v1256 = vsub.f32 %v1226, %v1176
    %v1257 = vsub.f32 %v1228, %v1177
    %v1258 = vsub.f32 %v1230, %v1178
    %v1259 = vsub.f32 %v1232, %v1179
    %v1260 = vsub.f32 %v1234, %v1180
    %v1261 = vsub.f32 %v1236, %v1181
    %v1262 = vsub.f32 %v1238, %v1182
    %v1263 = vsub.f32 %v1240, %v1183
    %v1264 = vsub.f32 %v1242, %v1184
    %v1265 = vsub.f32 %v1244, %v1185
    %v1266 = vsub.f32 %v1246, %v1186
    %v1267 = vsub.f32 %v1248, %v1187
    %v1268 = vsub.f32 %v1250, %v1188
    %v1269 = vsub.f32 %v1252, %v1189
    %v1270 = vsub.f32 %v1254, %v1190
    %v1271 = vmul.f32 %v1255, -1.0
    %v1272 = vmul.f32 %v1256, -1.0
    %v1273 = vmul.f32 %v1257, -1.0
    %v1274 = vmul.f32 %v1258, -1.0
    %v1275 = vmul.f32 %v1259, -1.0
    %v1276 = vmul.f32 %v1260, -1.0
    %v1277 = vmul.f32 %v1261, -1.0
    %v1278 = vmul.f32 %v1262, -1.0
    %v1279 = vmul.f32 %v1263, -1.0
    %v1280 = vmul.f32 %v1264, -1.0
    %v1281 = vmul.f32 %v1265, -1.0
    %v1282 = vmul.f32 %v1266, -1.0
    %v1283 = vmul.f32 %v1267, -1.0
    %v1284 = vmul.f32 %v1268, -1.0
    %v1285 = vmul.f32 %v1269, -1.0
    %v1286 = vmul.f32 %v1270, -1.0
    %vm1287 = vcmask 7168
    %1288 = vst.msk [vmem:[%s4] sm:$0xff] %vm1287, %v1271
    %1289 = vst.msk [vmem:[%s4 + $0x8] sm:$0xff] %vm1287, %v1272
    %1290 = vst.msk [vmem:[%s4 + $0x10] sm:$0xff] %vm1287, %v1273
    %1291 = vst.msk [vmem:[%s4 + $0x18] sm:$0xff] %vm1287, %v1274
    %1292 = vst.msk [vmem:[%s4 + $0x20] sm:$0xff] %vm1287, %v1275
    %1293 = vst.msk [vmem:[%s4 + $0x28] sm:$0xff] %vm1287, %v1276
    %1294 = vst.msk [vmem:[%s4 + $0x30] sm:$0xff] %vm1287, %v1277
    %1295 = vst.msk [vmem:[%s4 + $0x38] sm:$0xff] %vm1287, %v1278
    %1296 = vst.msk [vmem:[%s4 + $0x40] sm:$0xff] %vm1287, %v1279
    %1297 = vst.msk [vmem:[%s4 + $0x48] sm:$0xff] %vm1287, %v1280
    %1298 = vst.msk [vmem:[%s4 + $0x50] sm:$0xff] %vm1287, %v1281
    %1299 = vst.msk [vmem:[%s4 + $0x58] sm:$0xff] %vm1287, %v1282
    %1300 = vst.msk [vmem:[%s4 + $0x60] sm:$0xff] %vm1287, %v1283
    %1301 = vst.msk [vmem:[%s4 + $0x68] sm:$0xff] %vm1287, %v1284
    %1302 = vst.msk [vmem:[%s4 + $0x70] sm:$0xff] %vm1287, %v1285
    %1303 = vst.msk [vmem:[%s4 + $0x78] sm:$0xff] %vm1287, %v1286
  $region33: #{tpu_custom_call.1} parent=0 // pred_fallthru
    _
  // Predicated region
  $region34: #{tpu_custom_call.1} parent=0 // pred_check
    _
  $region35: #{tpu_custom_call.1} parent=0 // pred_check_branch
    %1305 = sbr.rel (0) target = $region37
  $region36: #{tpu_custom_call.1} parent=0 // pred_region
    _
  $region37: #{tpu_custom_call.1} parent=0 // pred_fallthru
    _
  // Predicated region
  $region38: #{tpu_custom_call.1} parent=0 // pred_check
    _
  $region39: #{tpu_custom_call.1} parent=0 // pred_check_branch
    %1307 = sbr.rel (0) target = $region41
  $region40: #{tpu_custom_call.1} parent=0 // pred_region
    _
  $region41: #{tpu_custom_call.1} parent=0 // pred_fallthru
    _

</llo_original>
